<compile_context>
chip_gen: v6e
topology: v6e:2x2x1
jax: 0.10.0
libtpu: 0.0.40
codegen_flags: <defaults>
</compile_context>

<pallas_src>
import functools

import jax
import jax.numpy as jnp
from jax.experimental import pallas as pl
from jax.experimental.pallas import tpu as pltpu

IN_DIM = 28 * 28          # 784
HID = 128                 # padded width for every hidden / latent dim
DEFAULT_TB = 1024         # batch tile upper bound


def _round_up(n, m):
    return ((n + m - 1) // m) * m


# ----------------------------- Pallas kernel -------------------------------
def autoencoder_kernel(
    x_ref,
    w0, b0, w1, b1, w2, b2, w3, b3,     # encoder params (bf16 weights, f32 biases)
    w4, b4, w5, b5, w6, b6, w7, b7,     # decoder params
    enc_ref, dec_ref,
):
    f32 = jnp.float32
    bf16 = jnp.bfloat16

    x = x_ref[...].astype(bf16)                         # (TB, 784)

    # ---- encoder: Linear->Tanh x3, then Linear ----
    h = jnp.tanh(jnp.dot(x, w0[...], preferred_element_type=f32) + b0[...])
    h = jnp.tanh(jnp.dot(h.astype(bf16), w1[...], preferred_element_type=f32) + b1[...])
    h = jnp.tanh(jnp.dot(h.astype(bf16), w2[...], preferred_element_type=f32) + b2[...])
    enc = jnp.dot(h.astype(bf16), w3[...], preferred_element_type=f32) + b3[...]  # (TB,128), cols 3.. are 0
    enc_ref[...] = enc.astype(enc_ref.dtype)            # lane-dense bf16 store; wrapper slices [:, :3]

    # ---- decoder: Linear->Tanh x3, then Linear->Sigmoid ----
    d = jnp.tanh(jnp.dot(enc.astype(bf16), w4[...], preferred_element_type=f32) + b4[...])
    d = jnp.tanh(jnp.dot(d.astype(bf16), w5[...], preferred_element_type=f32) + b5[...])
    d = jnp.tanh(jnp.dot(d.astype(bf16), w6[...], preferred_element_type=f32) + b6[...])
    logits = jnp.dot(d.astype(bf16), w7[...], preferred_element_type=f32) + b7[...]
    dec_ref[...] = jax.nn.sigmoid(logits).astype(dec_ref.dtype)


# ------------------------------- wrapper ------------------------------------
@functools.partial(jax.jit, static_argnames=("tb",))
def autoencoder_forward(x, prepared_params, tb=None):
    """x: (B, 784) float32. prepared_params: 16 arrays from prepare_params()."""
    B = x.shape[0]
    if tb is None:
        # aim for >= 2 grid steps (megacore sharding + DMA/compute overlap), cap at DEFAULT_TB
        Bp8 = _round_up(B, 8)
        half = _round_up((Bp8 + 1) // 2, 8)
        tb = max(8, min(DEFAULT_TB, half))
    tb = max(8, _round_up(int(tb), 8))
    Bp = _round_up(B, tb)
    if Bp != B:
        x = jnp.pad(x, ((0, Bp - B), (0, 0)))
    grid = (Bp // tb,)

    # Weights/biases: full-array blocks, constant index_map -> resident in VMEM, single DMA.
    param_specs = [
        pl.BlockSpec(p.shape, lambda i: (0, 0)) for p in prepared_params
    ]
    in_specs = [pl.BlockSpec((tb, IN_DIM), lambda i: (i, 0))] + param_specs
    out_specs = (
        pl.BlockSpec((tb, HID), lambda i: (i, 0)),      # encoded (lane-dense bf16 slab)
        pl.BlockSpec((tb, IN_DIM), lambda i: (i, 0)),   # decoded
    )

    param_bytes = sum(int(p.size) * p.dtype.itemsize for p in prepared_params)
    cost = pl.CostEstimate(
        flops=2 * Bp * (IN_DIM * HID + 6 * HID * HID + HID * IN_DIM),
        transcendentals=Bp * (6 * HID + IN_DIM),
        bytes_accessed=Bp * IN_DIM * 4 * 2 + Bp * HID * 2 + param_bytes,
    )

    enc_full, dec_full = pl.pallas_call(
        autoencoder_kernel,
        grid=grid,
        in_specs=in_specs,
        out_specs=out_specs,
        out_shape=(
            jax.ShapeDtypeStruct((Bp, HID), jnp.bfloat16),
            jax.ShapeDtypeStruct((Bp, IN_DIM), jnp.float32),
        ),
        compiler_params=pltpu.CompilerParams(
            dimension_semantics=("parallel",),
            vmem_limit_bytes=48 * 1024 * 1024,   # fits v7x's 64 MiB physical VMEM with headroom
        ),
        cost_estimate=cost,
    )(x, *prepared_params)

    encoded = enc_full[:B, :3].astype(jnp.float32)
    decoded = dec_full[:B, :]
    return encoded, decoded


# ------------------------- param init & preparation --------------------------
def init_linear(key, fan_in, fan_out):
    """Mimic PyTorch nn.Linear default init: U(-1/sqrt(fan_in), 1/sqrt(fan_in)).
    Weight stored as (in, out) so y = x @ W + b matches nn.Linear."""
    kw, kb = jax.random.split(key)
    bound = 1.0 / jnp.sqrt(jnp.float32(fan_in))
    w = jax.random.uniform(kw, (fan_in, fan_out), jnp.float32, -bound, bound)
    b = jax.random.uniform(kb, (1, fan_out), jnp.float32, -bound, bound)
    return w, b


def make_params(key):
    enc_dims = [(IN_DIM, 128), (128, 64), (64, 12), (12, 3)]
    dec_dims = [(3, 12), (12, 64), (64, 128), (128, IN_DIM)]
    keys = jax.random.split(key, len(enc_dims) + len(dec_dims))
    params = []
    for k, (fi, fo) in zip(keys, enc_dims + dec_dims):
        w, b = init_linear(k, fi, fo)
        params.extend([w, b])
    return params


def _pad2d(a, rows, cols):
    return jnp.pad(a, ((0, rows - a.shape[0]), (0, cols - a.shape[1])))


def prepare_params(params):
    """Zero-pad tiny hidden dims to 128 lanes, cast ALL weights to bf16 (single-pass MXU),
    keep biases f32. Zero padding is exact: padded activation columns are tanh(0)=0 and
    multiply zero weight rows/cols; padded bias entries are zero."""
    bf16 = jnp.bfloat16
    w0, b0, w1, b1, w2, b2, w3, b3, w4, b4, w5, b5, w6, b6, w7, b7 = params
    prepared = [
        w0.astype(bf16), b0,                                        # 784->128
        _pad2d(w1, 128, HID).astype(bf16), _pad2d(b1, 1, HID),      # 128->64   (pad cols)
        _pad2d(w2, HID, HID).astype(bf16), _pad2d(b2, 1, HID),      # 64->12    (pad rows+cols)
        _pad2d(w3, HID, HID).astype(bf16), _pad2d(b3, 1, HID),      # 12->3
        _pad2d(w4, HID, HID).astype(bf16), _pad2d(b4, 1, HID),      # 3->12
        _pad2d(w5, HID, HID).astype(bf16), _pad2d(b5, 1, HID),      # 12->64
        _pad2d(w6, HID, HID).astype(bf16), b6,                      # 64->128   (pad rows)
        w7.astype(bf16), b7,                                        # 128->784
    ]
    return [jax.device_put(p) for p in prepared]


# ----------------------------- pure-JAX reference -----------------------------
def reference_forward(x, params):
    w0, b0, w1, b1, w2, b2, w3, b3, w4, b4, w5, b5, w6, b6, w7, b7 = params
    h = jnp.tanh(x @ w0 + b0)
    h = jnp.tanh(h @ w1 + b1)
    h = jnp.tanh(h @ w2 + b2)
    enc = h @ w3 + b3
    d = jnp.tanh(enc @ w4 + b4)
    d = jnp.tanh(d @ w5 + b5)
    d = jnp.tanh(d @ w6 + b6)
    dec = jax.nn.sigmoid(d @ w7 + b7)
    return enc, dec


# --------------------------------- main --------------------------------------
if __name__ == "__main__":
    key = jax.random.PRNGKey(0)
    k_params, k_x = jax.random.split(key)

    B = 32
    x = jax.random.uniform(k_x, (B, IN_DIM), jnp.float32)  # like normalized MNIST pixels
    params = make_params(k_params)
    prepared = prepare_params(params)

    encoded, decoded = autoencoder_forward(x, prepared)
    jax.block_until_ready((encoded, decoded))

    # sanity: shapes / dtypes / sigmoid range match the PyTorch module's forward
    assert encoded.shape == (B, 3) and encoded.dtype == jnp.float32
    assert decoded.shape == (B, IN_DIM) and decoded.dtype == jnp.float32
    assert bool(jnp.all((decoded >= 0.0) & (decoded <= 1.0)))

    # numerical check vs pure-f32 reference (bf16 matmul operands, f32 accumulation)
    enc_ref, dec_ref = reference_forward(x, params)
    assert bool(jnp.allclose(encoded, enc_ref, atol=3e-2, rtol=3e-2)), "encoded mismatch"
    assert bool(jnp.allclose(decoded, dec_ref, atol=2e-2, rtol=2e-2)), "decoded mismatch"

    print("KERNEL_OK")
</pallas_src>

<mosaic_0001>
module attributes {stable_mosaic.version = 11 : i64} {
  func.func @autoencoder_kernel(%arg0: i32, %arg1: memref<16x784xf32, #tpu.memory_space<vmem>>, %arg2: memref<784x128xbf16, #tpu.memory_space<vmem>>, %arg3: memref<1x128xf32, #tpu.memory_space<vmem>>, %arg4: memref<128x128xbf16, #tpu.memory_space<vmem>>, %arg5: memref<1x128xf32, #tpu.memory_space<vmem>>, %arg6: memref<128x128xbf16, #tpu.memory_space<vmem>>, %arg7: memref<1x128xf32, #tpu.memory_space<vmem>>, %arg8: memref<128x128xbf16, #tpu.memory_space<vmem>>, %arg9: memref<1x128xf32, #tpu.memory_space<vmem>>, %arg10: memref<128x128xbf16, #tpu.memory_space<vmem>>, %arg11: memref<1x128xf32, #tpu.memory_space<vmem>>, %arg12: memref<128x128xbf16, #tpu.memory_space<vmem>>, %arg13: memref<1x128xf32, #tpu.memory_space<vmem>>, %arg14: memref<128x128xbf16, #tpu.memory_space<vmem>>, %arg15: memref<1x128xf32, #tpu.memory_space<vmem>>, %arg16: memref<128x784xbf16, #tpu.memory_space<vmem>>, %arg17: memref<1x784xf32, #tpu.memory_space<vmem>>, %arg18: memref<16x128xbf16, #tpu.memory_space<vmem>>, %arg19: memref<16x784xf32, #tpu.memory_space<vmem>>) attributes {dimension_semantics = [#tpu.dimension_semantics<parallel>], iteration_bounds = array<i64: 2>, scalar_prefetch = 0 : i64, scratch_operands = 0 : i64, tpu.core_type = #tpu.core_type<tc>, window_params = [{transform_indices = @transform_0, window_bounds = array<i64: 16, 784>}, {pipeline_mode = #tpu.pipeline_mode<synchronous>, transform_indices = @transform_1, window_bounds = array<i64: 784, 128>}, {pipeline_mode = #tpu.pipeline_mode<synchronous>, transform_indices = @transform_2, window_bounds = array<i64: 1, 128>}, {pipeline_mode = #tpu.pipeline_mode<synchronous>, transform_indices = @transform_3, window_bounds = array<i64: 128, 128>}, {pipeline_mode = #tpu.pipeline_mode<synchronous>, transform_indices = @transform_4, window_bounds = array<i64: 1, 128>}, {pipeline_mode = #tpu.pipeline_mode<synchronous>, transform_indices = @transform_5, window_bounds = array<i64: 128, 128>}, {pipeline_mode = #tpu.pipeline_mode<synchronous>, transform_indices = @transform_6, window_bounds = array<i64: 1, 128>}, {pipeline_mode = #tpu.pipeline_mode<synchronous>, transform_indices = @transform_7, window_bounds = array<i64: 128, 128>}, {pipeline_mode = #tpu.pipeline_mode<synchronous>, transform_indices = @transform_8, window_bounds = array<i64: 1, 128>}, {pipeline_mode = #tpu.pipeline_mode<synchronous>, transform_indices = @transform_9, window_bounds = array<i64: 128, 128>}, {pipeline_mode = #tpu.pipeline_mode<synchronous>, transform_indices = @transform_10, window_bounds = array<i64: 1, 128>}, {pipeline_mode = #tpu.pipeline_mode<synchronous>, transform_indices = @transform_11, window_bounds = array<i64: 128, 128>}, {pipeline_mode = #tpu.pipeline_mode<synchronous>, transform_indices = @transform_12, window_bounds = array<i64: 1, 128>}, {pipeline_mode = #tpu.pipeline_mode<synchronous>, transform_indices = @transform_13, window_bounds = array<i64: 128, 128>}, {pipeline_mode = #tpu.pipeline_mode<synchronous>, transform_indices = @transform_14, window_bounds = array<i64: 1, 128>}, {pipeline_mode = #tpu.pipeline_mode<synchronous>, transform_indices = @transform_15, window_bounds = array<i64: 128, 784>}, {pipeline_mode = #tpu.pipeline_mode<synchronous>, transform_indices = @transform_16, window_bounds = array<i64: 1, 784>}, {transform_indices = @transform_17, window_bounds = array<i64: 16, 128>}, {transform_indices = @transform_18, window_bounds = array<i64: 16, 784>}]} {
    %c0 = arith.constant 0 : index
    %c0_0 = arith.constant 0 : index
    %0 = vector.load %arg1[%c0, %c0_0] : memref<16x784xf32, #tpu.memory_space<vmem>>, vector<16x784xf32>
    %1 = arith.truncf %0 : vector<16x784xf32> to vector<16x784xbf16>
    %c0_1 = arith.constant 0 : index
    %c0_2 = arith.constant 0 : index
    %2 = vector.load %arg2[%c0_1, %c0_2] : memref<784x128xbf16, #tpu.memory_space<vmem>>, vector<784x128xbf16>
    %cst = arith.constant dense<0.000000e+00> : vector<16x128xf32>
    %3 = tpu.matmul %1, %2, %cst {dimension_numbers = #tpu.dot_dimension_numbers<[1], [0], [0], [1], [0, 0, 1, 1], [], []>} : vector<16x784xbf16>, vector<784x128xbf16>, vector<16x128xf32> -> vector<16x128xf32>
    %c0_3 = arith.constant 0 : index
    %c0_4 = arith.constant 0 : index
    %4 = vector.load %arg3[%c0_3, %c0_4] : memref<1x128xf32, #tpu.memory_space<vmem>>, vector<1x128xf32>
    %5 = vector.broadcast %4 : vector<1x128xf32> to vector<16x128xf32>
    %6 = arith.addf %3, %5 : vector<16x128xf32>
    %7 = math.tanh %6 : vector<16x128xf32>
    %8 = arith.truncf %7 : vector<16x128xf32> to vector<16x128xbf16>
    %c0_5 = arith.constant 0 : index
    %c0_6 = arith.constant 0 : index
    %9 = vector.load %arg4[%c0_5, %c0_6] : memref<128x128xbf16, #tpu.memory_space<vmem>>, vector<128x128xbf16>
    %cst_7 = arith.constant dense<0.000000e+00> : vector<16x128xf32>
    %10 = tpu.matmul %8, %9, %cst_7 {dimension_numbers = #tpu.dot_dimension_numbers<[1], [0], [0], [1], [0, 0, 1, 1], [], []>} : vector<16x128xbf16>, vector<128x128xbf16>, vector<16x128xf32> -> vector<16x128xf32>
    %c0_8 = arith.constant 0 : index
    %c0_9 = arith.constant 0 : index
    %11 = vector.load %arg5[%c0_8, %c0_9] : memref<1x128xf32, #tpu.memory_space<vmem>>, vector<1x128xf32>
    %12 = vector.broadcast %11 : vector<1x128xf32> to vector<16x128xf32>
    %13 = arith.addf %10, %12 : vector<16x128xf32>
    %14 = math.tanh %13 : vector<16x128xf32>
    %15 = arith.truncf %14 : vector<16x128xf32> to vector<16x128xbf16>
    %c0_10 = arith.constant 0 : index
    %c0_11 = arith.constant 0 : index
    %16 = vector.load %arg6[%c0_10, %c0_11] : memref<128x128xbf16, #tpu.memory_space<vmem>>, vector<128x128xbf16>
    %cst_12 = arith.constant dense<0.000000e+00> : vector<16x128xf32>
    %17 = tpu.matmul %15, %16, %cst_12 {dimension_numbers = #tpu.dot_dimension_numbers<[1], [0], [0], [1], [0, 0, 1, 1], [], []>} : vector<16x128xbf16>, vector<128x128xbf16>, vector<16x128xf32> -> vector<16x128xf32>
    %c0_13 = arith.constant 0 : index
    %c0_14 = arith.constant 0 : index
    %18 = vector.load %arg7[%c0_13, %c0_14] : memref<1x128xf32, #tpu.memory_space<vmem>>, vector<1x128xf32>
    %19 = vector.broadcast %18 : vector<1x128xf32> to vector<16x128xf32>
    %20 = arith.addf %17, %19 : vector<16x128xf32>
    %21 = math.tanh %20 : vector<16x128xf32>
    %22 = arith.truncf %21 : vector<16x128xf32> to vector<16x128xbf16>
    %c0_15 = arith.constant 0 : index
    %c0_16 = arith.constant 0 : index
    %23 = vector.load %arg8[%c0_15, %c0_16] : memref<128x128xbf16, #tpu.memory_space<vmem>>, vector<128x128xbf16>
    %cst_17 = arith.constant dense<0.000000e+00> : vector<16x128xf32>
    %24 = tpu.matmul %22, %23, %cst_17 {dimension_numbers = #tpu.dot_dimension_numbers<[1], [0], [0], [1], [0, 0, 1, 1], [], []>} : vector<16x128xbf16>, vector<128x128xbf16>, vector<16x128xf32> -> vector<16x128xf32>
    %c0_18 = arith.constant 0 : index
    %c0_19 = arith.constant 0 : index
    %25 = vector.load %arg9[%c0_18, %c0_19] : memref<1x128xf32, #tpu.memory_space<vmem>>, vector<1x128xf32>
    %26 = vector.broadcast %25 : vector<1x128xf32> to vector<16x128xf32>
    %27 = arith.addf %24, %26 : vector<16x128xf32>
    %28 = arith.truncf %27 : vector<16x128xf32> to vector<16x128xbf16>
    %c0_20 = arith.constant 0 : index
    %c0_21 = arith.constant 0 : index
    %29 = vector.load %arg18[%c0_20, %c0_21] : memref<16x128xbf16, #tpu.memory_space<vmem>>, vector<16x128xbf16>
    tpu.vector_store %arg18[%c0_20, %c0_21], %28 {strides = array<i32>} : memref<16x128xbf16, #tpu.memory_space<vmem>>, vector<16x128xbf16>,
    %30 = arith.truncf %27 : vector<16x128xf32> to vector<16x128xbf16>
    %c0_22 = arith.constant 0 : index
    %c0_23 = arith.constant 0 : index
    %31 = vector.load %arg10[%c0_22, %c0_23] : memref<128x128xbf16, #tpu.memory_space<vmem>>, vector<128x128xbf16>
    %cst_24 = arith.constant dense<0.000000e+00> : vector<16x128xf32>
    %32 = tpu.matmul %30, %31, %cst_24 {dimension_numbers = #tpu.dot_dimension_numbers<[1], [0], [0], [1], [0, 0, 1, 1], [], []>} : vector<16x128xbf16>, vector<128x128xbf16>, vector<16x128xf32> -> vector<16x128xf32>
    %c0_25 = arith.constant 0 : index
    %c0_26 = arith.constant 0 : index
    %33 = vector.load %arg11[%c0_25, %c0_26] : memref<1x128xf32, #tpu.memory_space<vmem>>, vector<1x128xf32>
    %34 = vector.broadcast %33 : vector<1x128xf32> to vector<16x128xf32>
    %35 = arith.addf %32, %34 : vector<16x128xf32>
    %36 = math.tanh %35 : vector<16x128xf32>
    %37 = arith.truncf %36 : vector<16x128xf32> to vector<16x128xbf16>
    %c0_27 = arith.constant 0 : index
    %c0_28 = arith.constant 0 : index
    %38 = vector.load %arg12[%c0_27, %c0_28] : memref<128x128xbf16, #tpu.memory_space<vmem>>, vector<128x128xbf16>
    %cst_29 = arith.constant dense<0.000000e+00> : vector<16x128xf32>
    %39 = tpu.matmul %37, %38, %cst_29 {dimension_numbers = #tpu.dot_dimension_numbers<[1], [0], [0], [1], [0, 0, 1, 1], [], []>} : vector<16x128xbf16>, vector<128x128xbf16>, vector<16x128xf32> -> vector<16x128xf32>
    %c0_30 = arith.constant 0 : index
    %c0_31 = arith.constant 0 : index
    %40 = vector.load %arg13[%c0_30, %c0_31] : memref<1x128xf32, #tpu.memory_space<vmem>>, vector<1x128xf32>
    %41 = vector.broadcast %40 : vector<1x128xf32> to vector<16x128xf32>
    %42 = arith.addf %39, %41 : vector<16x128xf32>
    %43 = math.tanh %42 : vector<16x128xf32>
    %44 = arith.truncf %43 : vector<16x128xf32> to vector<16x128xbf16>
    %c0_32 = arith.constant 0 : index
    %c0_33 = arith.constant 0 : index
    %45 = vector.load %arg14[%c0_32, %c0_33] : memref<128x128xbf16, #tpu.memory_space<vmem>>, vector<128x128xbf16>
    %cst_34 = arith.constant dense<0.000000e+00> : vector<16x128xf32>
    %46 = tpu.matmul %44, %45, %cst_34 {dimension_numbers = #tpu.dot_dimension_numbers<[1], [0], [0], [1], [0, 0, 1, 1], [], []>} : vector<16x128xbf16>, vector<128x128xbf16>, vector<16x128xf32> -> vector<16x128xf32>
    %c0_35 = arith.constant 0 : index
    %c0_36 = arith.constant 0 : index
    %47 = vector.load %arg15[%c0_35, %c0_36] : memref<1x128xf32, #tpu.memory_space<vmem>>, vector<1x128xf32>
    %48 = vector.broadcast %47 : vector<1x128xf32> to vector<16x128xf32>
    %49 = arith.addf %46, %48 : vector<16x128xf32>
    %50 = math.tanh %49 : vector<16x128xf32>
    %51 = arith.truncf %50 : vector<16x128xf32> to vector<16x128xbf16>
    %c0_37 = arith.constant 0 : index
    %c0_38 = arith.constant 0 : index
    %52 = vector.load %arg16[%c0_37, %c0_38] : memref<128x784xbf16, #tpu.memory_space<vmem>>, vector<128x784xbf16>
    %cst_39 = arith.constant dense<0.000000e+00> : vector<16x784xf32>
    %53 = tpu.matmul %51, %52, %cst_39 {dimension_numbers = #tpu.dot_dimension_numbers<[1], [0], [0], [1], [0, 0, 1, 1], [], []>} : vector<16x128xbf16>, vector<128x784xbf16>, vector<16x784xf32> -> vector<16x784xf32>
    %c0_40 = arith.constant 0 : index
    %c0_41 = arith.constant 0 : index
    %54 = vector.load %arg17[%c0_40, %c0_41] : memref<1x784xf32, #tpu.memory_space<vmem>>, vector<1x784xf32>
    %55 = vector.broadcast %54 : vector<1x784xf32> to vector<16x784xf32>
    %56 = arith.addf %53, %55 : vector<16x784xf32>
    %57 = arith.negf %56 : vector<16x784xf32>
    %58 = math.exp %57 : vector<16x784xf32>
    %cst_42 = arith.constant 1.000000e+00 : f32
    %59 = vector.broadcast %cst_42 : f32 to vector<16x784xf32>
    %60 = arith.addf %59, %58 : vector<16x784xf32>
    %61 = arith.divf %59, %60 : vector<16x784xf32>
    %c0_43 = arith.constant 0 : index
    %c0_44 = arith.constant 0 : index
    %62 = vector.load %arg19[%c0_43, %c0_44] : memref<16x784xf32, #tpu.memory_space<vmem>>, vector<16x784xf32>
    tpu.vector_store %arg19[%c0_43, %c0_44], %61 {strides = array<i32>} : memref<16x784xf32, #tpu.memory_space<vmem>>, vector<16x784xf32>,
    return
  }
  func.func @transform_0(%arg0: i32) -> (i32, i32) {
    %c0_i32 = arith.constant 0 : i32
    %c0_i32_0 = arith.constant 0 : i32
    return %arg0, %c0_i32 : i32, i32
  }
  func.func @transform_1(%arg0: i32) -> (i32, i32) {
    %c0_i32 = arith.constant 0 : i32
    %c0_i32_0 = arith.constant 0 : i32
    %c0_i32_1 = arith.constant 0 : i32
    return %c0_i32, %c0_i32_0 : i32, i32
  }
  func.func @transform_2(%arg0: i32) -> (i32, i32) {
    %c0_i32 = arith.constant 0 : i32
    %c0_i32_0 = arith.constant 0 : i32
    %c0_i32_1 = arith.constant 0 : i32
    return %c0_i32, %c0_i32_0 : i32, i32
  }
  func.func @transform_3(%arg0: i32) -> (i32, i32) {
    %c0_i32 = arith.constant 0 : i32
    %c0_i32_0 = arith.constant 0 : i32
    %c0_i32_1 = arith.constant 0 : i32
    return %c0_i32, %c0_i32_0 : i32, i32
  }
  func.func @transform_4(%arg0: i32) -> (i32, i32) {
    %c0_i32 = arith.constant 0 : i32
    %c0_i32_0 = arith.constant 0 : i32
    %c0_i32_1 = arith.constant 0 : i32
    return %c0_i32, %c0_i32_0 : i32, i32
  }
  func.func @transform_5(%arg0: i32) -> (i32, i32) {
    %c0_i32 = arith.constant 0 : i32
    %c0_i32_0 = arith.constant 0 : i32
    %c0_i32_1 = arith.constant 0 : i32
    return %c0_i32, %c0_i32_0 : i32, i32
  }
  func.func @transform_6(%arg0: i32) -> (i32, i32) {
    %c0_i32 = arith.constant 0 : i32
    %c0_i32_0 = arith.constant 0 : i32
    %c0_i32_1 = arith.constant 0 : i32
    return %c0_i32, %c0_i32_0 : i32, i32
  }
  func.func @transform_7(%arg0: i32) -> (i32, i32) {
    %c0_i32 = arith.constant 0 : i32
    %c0_i32_0 = arith.constant 0 : i32
    %c0_i32_1 = arith.constant 0 : i32
    return %c0_i32, %c0_i32_0 : i32, i32
  }
  func.func @transform_8(%arg0: i32) -> (i32, i32) {
    %c0_i32 = arith.constant 0 : i32
    %c0_i32_0 = arith.constant 0 : i32
    %c0_i32_1 = arith.constant 0 : i32
    return %c0_i32, %c0_i32_0 : i32, i32
  }
  func.func @transform_9(%arg0: i32) -> (i32, i32) {
    %c0_i32 = arith.constant 0 : i32
    %c0_i32_0 = arith.constant 0 : i32
    %c0_i32_1 = arith.constant 0 : i32
    return %c0_i32, %c0_i32_0 : i32, i32
  }
  func.func @transform_10(%arg0: i32) -> (i32, i32) {
    %c0_i32 = arith.constant 0 : i32
    %c0_i32_0 = arith.constant 0 : i32
    %c0_i32_1 = arith.constant 0 : i32
    return %c0_i32, %c0_i32_0 : i32, i32
  }
  func.func @transform_11(%arg0: i32) -> (i32, i32) {
    %c0_i32 = arith.constant 0 : i32
    %c0_i32_0 = arith.constant 0 : i32
    %c0_i32_1 = arith.constant 0 : i32
    return %c0_i32, %c0_i32_0 : i32, i32
  }
  func.func @transform_12(%arg0: i32) -> (i32, i32) {
    %c0_i32 = arith.constant 0 : i32
    %c0_i32_0 = arith.constant 0 : i32
    %c0_i32_1 = arith.constant 0 : i32
    return %c0_i32, %c0_i32_0 : i32, i32
  }
  func.func @transform_13(%arg0: i32) -> (i32, i32) {
    %c0_i32 = arith.constant 0 : i32
    %c0_i32_0 = arith.constant 0 : i32
    %c0_i32_1 = arith.constant 0 : i32
    return %c0_i32, %c0_i32_0 : i32, i32
  }
  func.func @transform_14(%arg0: i32) -> (i32, i32) {
    %c0_i32 = arith.constant 0 : i32
    %c0_i32_0 = arith.constant 0 : i32
    %c0_i32_1 = arith.constant 0 : i32
    return %c0_i32, %c0_i32_0 : i32, i32
  }
  func.func @transform_15(%arg0: i32) -> (i32, i32) {
    %c0_i32 = arith.constant 0 : i32
    %c0_i32_0 = arith.constant 0 : i32
    %c0_i32_1 = arith.constant 0 : i32
    return %c0_i32, %c0_i32_0 : i32, i32
  }
  func.func @transform_16(%arg0: i32) -> (i32, i32) {
    %c0_i32 = arith.constant 0 : i32
    %c0_i32_0 = arith.constant 0 : i32
    %c0_i32_1 = arith.constant 0 : i32
    return %c0_i32, %c0_i32_0 : i32, i32
  }
  func.func @transform_17(%arg0: i32) -> (i32, i32) {
    %c0_i32 = arith.constant 0 : i32
    %c0_i32_0 = arith.constant 0 : i32
    return %arg0, %c0_i32 : i32, i32
  }
  func.func @transform_18(%arg0: i32) -> (i32, i32) {
    %c0_i32 = arith.constant 0 : i32
    %c0_i32_0 = arith.constant 0 : i32
    return %arg0, %c0_i32 : i32, i32
  }
}

</mosaic_0001>

<llo_original>
// kernel: autoencoder_forward.1
$region0: #{autoencoder_forward.1}
  #allocation0 [shape = 'u32[]', space=smem, size = 0x4, offset = 0x4, fixed_abs, tag = 'smem constant byte address 0x4 - core index']
  #allocation1 [shape = 'u32[144,128]{1,0:T(1,128)}', space=vmem, size = 0x12000, scoped, tag = 'internal scratch']
  %s0 = inlined_call_operand.vmem [shape: f32[32,784], index: 0, kind: input, shape index: {}]
  %s1 = inlined_call_operand.vmem [shape: bf16[784,128], index: 1, kind: input, shape index: {}]
  %s2 = inlined_call_operand.vmem [shape: f32[1,128], index: 2, kind: input, shape index: {}]
  %s3 = inlined_call_operand.vmem [shape: bf16[128,128], index: 3, kind: input, shape index: {}]
  %s4 = inlined_call_operand.vmem [shape: f32[1,128], index: 4, kind: input, shape index: {}]
  %s5 = inlined_call_operand.vmem [shape: bf16[128,128], index: 5, kind: input, shape index: {}]
  %s6 = inlined_call_operand.vmem [shape: f32[1,128], index: 6, kind: input, shape index: {}]
  %s7 = inlined_call_operand.vmem [shape: bf16[128,128], index: 7, kind: input, shape index: {}]
  %s8 = inlined_call_operand.vmem [shape: f32[1,128], index: 8, kind: input, shape index: {}]
  %s9 = inlined_call_operand.hbm [shape: bf16[128,128], index: 9, kind: input, shape index: {}]
  %s10 = inlined_call_operand.vmem [shape: f32[1,128], index: 10, kind: input, shape index: {}]
  %s11 = inlined_call_operand.hbm [shape: bf16[128,128], index: 11, kind: input, shape index: {}]
  %s12 = inlined_call_operand.vmem [shape: f32[1,128], index: 12, kind: input, shape index: {}]
  %s13 = inlined_call_operand.hbm [shape: bf16[128,128], index: 13, kind: input, shape index: {}]
  %s14 = inlined_call_operand.vmem [shape: f32[1,128], index: 14, kind: input, shape index: {}]
  %s15 = inlined_call_operand.vmem [shape: bf16[128,784], index: 15, kind: input, shape index: {}]
  %s16 = inlined_call_operand.vmem [shape: f32[1,784], index: 16, kind: input, shape index: {}]
  %s17 = inlined_call_operand.vmem [shape: bf16[32,128], index: 17, kind: output, shape index: {0}]
  %s18 = inlined_call_operand.hbm [shape: f32[32,784], index: 18, kind: output, shape index: {1}]
  %19 = xla_tuple %s17, %s18
  %s20 = sld [smem:[#allocation0]]
  $region121: #{autoencoder_forward.1} parent=0
    _
  %s22 = ssub.s32 1, %s20
  %s23 = scalar_select 0, %s22, %s20
  $region1: #{autoencoder_forward.1} parent=0
    #allocation2 [shape = 'u8[32768]{0}', space=vmem, size = 0x8000, scoped, tag = 'input window, operand 9, single buffered']
    #allocation3 [shape = 's32[2]{0}', space=sflag, size = 0x8, scoped, tag = 'scoped memory for autoencoder_forward.1']
    #allocation4 [shape = 's32[2]{0}', space=sflag, size = 0x8, scoped, tag = 'scoped memory for autoencoder_forward.1']
    #allocation5 [shape = 'u8[32768]{0}', space=vmem, size = 0x8000, scoped, tag = 'input window, operand 11, single buffered']
    #allocation6 [shape = 's32[1]{0}', space=sflag, size = 0x4, scoped, tag = 'scoped memory for autoencoder_forward.1']
    #allocation7 [shape = 'u8[32768]{0}', space=vmem, size = 0x8000, scoped, tag = 'input window, operand 13, single buffered']
    #allocation8 [shape = 'u8[114688]{0}', space=vmem, size = 0x1c000, scoped, tag = 'output window, operand 1']
    %24 = vsyncpa [#allocation3], 0
    %25 = vsyncpa [#allocation6], 0
    %26 = vsyncpa [#allocation4], 0
    %s27 = scalar_lea.sflag [#allocation4], 1
    %28 = vsyncpa %s27, 0
    loop: start=0, step=1, limit=4
    $region2: #{autoencoder_forward.1} parent=1 // loop_pre_header
      _
    $region3: #{autoencoder_forward.1} parent=1 // loop_header
      %s30 = sphi 0, %s34
      %p31 = scmp.ge.s32.totalorder %s30, 4
      %s40 = sphi 0, %s42
      %s43 = sphi 0, %s40
      %s44 = sphi 0, %s43
      %s60 = sphi 0, %s44
      %s64 = sphi 0, %s64
      %s66 = sphi 0, %s64
      %s67 = sphi 0, %s66
      %s81 = sphi 0, %s67
      %s85 = sphi 0, %s85
      %s87 = sphi 0, %s85
      %s88 = sphi 0, %s87
      %s102 = sphi 0, %s88
      %s106 = sphi 0, %s106
      %s108 = sphi 0, %s106
      %s109 = sphi 0, %s108
      %s123 = sphi 0, %s109
      %s127 = sphi 0, %s127
      %s129 = sphi 0, %s127
      %s130 = sphi 0, %s129
      %s144 = sphi 0, %s130
      %s148 = sphi 0, %s148
      %s150 = sphi 0, %s148
      %s151 = sphi 0, %s150
      %s165 = sphi 0, %s151
      %s169 = sphi 0, %s169
      %s171 = sphi 0, %s169
      %s172 = sphi 0, %s171
      %s186 = sphi 0, %s172
      %s190 = sphi 0, %s190
      %s192 = sphi 0, %s190
      %s193 = sphi 0, %s192
      %s207 = sphi 0, %s193
      %s211 = sphi 0, %s211
      %s213 = sphi 0, %s211
      %s214 = sphi 0, %s213
      %s228 = sphi 0, %s214
      %s232 = sphi 0, %s232
      %s234 = sphi 0, %s232
      %s235 = sphi 0, %s234
      %s249 = sphi 0, %s235
      %s253 = sphi 0, %s253
      %s255 = sphi 0, %s253
      %s256 = sphi 0, %s255
      %s270 = sphi 0, %s256
      %s274 = sphi 0, %s274
      %s276 = sphi 0, %s274
      %s277 = sphi 0, %s276
      %s291 = sphi 0, %s277
      %s295 = sphi 0, %s295
      %s297 = sphi 0, %s295
      %s298 = sphi 0, %s297
      %s312 = sphi 0, %s298
      %s316 = sphi 0, %s316
      %s318 = sphi 0, %s316
      %s319 = sphi 0, %s318
      %s333 = sphi 0, %s319
      %s337 = sphi 0, %s337
      %s339 = sphi 0, %s337
      %s340 = sphi 0, %s339
      %s354 = sphi 0, %s340
      %s358 = sphi 0, %s358
      %s360 = sphi 0, %s358
      %s361 = sphi 0, %s360
      %s375 = sphi 0, %s361
      %s379 = sphi 0, %s379
      %s381 = sphi 0, %s379
      %s382 = sphi 0, %s381
      %s396 = sphi 0, %s382
      %s402 = sphi 0, %s404
      %s405 = sphi 0, %s402
      %s406 = sphi 0, %s405
      %s422 = sphi 0, %s406
      %s428 = sphi 0, %s430
      %s431 = sphi 0, %s428
      %s432 = sphi 0, %s431
      %s448 = sphi 0, %s432
    $region4: #{autoencoder_forward.1} parent=1 // loop_header_branch
      %33 = sbr.rel (%p31) target = $region8
    $region5: #{autoencoder_forward.1} parent=1 // loop_body
      %s35 = ssub.s32 %s30, 1
      %s36 = ssub.s32 %s30, 2
      %s37 = sadd.s32 %s30, 1
      %s38 = ssub.s32 %s30, %s37
      %p39 = scmp.eq.s32.totalorder %s38, 0
      %s41 = sadd.s32 %s40, 1
      %s42 = scalar_select %p39, %s40, %s41
      %p45 = pneg %p39
      %p46 = scmp.eq.s32.totalorder %s30, 1
      %p47 = por %p45, %p46
      %p48 = scmp.ne.s32.totalorder %s40, %s43
      %p49 = scmp.eq.s32.totalorder %s30, 0
      %p50 = por %p48, %p49
      %p51 = scmp.ne.s32.totalorder %s40, %s43
      %p52 = scmp.eq.s32.totalorder %s35, 1
      %p53 = por %p51, %p52
      %p54 = scmp.ne.s32.totalorder %s43, %s44
      %p55 = scmp.eq.s32.totalorder %s35, 0
      %p56 = por %p54, %p55
      %p57 = scmp.ne.s32.totalorder %s43, %s44
      %p58 = scmp.eq.s32.totalorder %s36, 1
      %p59 = por %p57, %p58
      %p61 = scmp.ne.s32.totalorder %s44, %s60
      %p62 = scmp.eq.s32.totalorder %s36, 0
      %p63 = por %p61, %p62
      %s65 = sadd.s32 %s64, 1
      %p68 = scmp.eq.s32.totalorder %s30, 1
      %p69 = scmp.ne.s32.totalorder %s64, %s66
      %p70 = scmp.eq.s32.totalorder %s30, 0
      %p71 = por %p69, %p70
      %p72 = scmp.ne.s32.totalorder %s64, %s66
      %p73 = scmp.eq.s32.totalorder %s35, 1
      %p74 = por %p72, %p73
      %p75 = scmp.ne.s32.totalorder %s66, %s67
      %p76 = scmp.eq.s32.totalorder %s35, 0
      %p77 = por %p75, %p76
      %p78 = scmp.ne.s32.totalorder %s66, %s67
      %p79 = scmp.eq.s32.totalorder %s36, 1
      %p80 = por %p78, %p79
      %p82 = scmp.ne.s32.totalorder %s67, %s81
      %p83 = scmp.eq.s32.totalorder %s36, 0
      %p84 = por %p82, %p83
      %s86 = sadd.s32 %s85, 1
      %p89 = scmp.eq.s32.totalorder %s30, 1
      %p90 = scmp.ne.s32.totalorder %s85, %s87
      %p91 = scmp.eq.s32.totalorder %s30, 0
      %p92 = por %p90, %p91
      %p93 = scmp.ne.s32.totalorder %s85, %s87
      %p94 = scmp.eq.s32.totalorder %s35, 1
      %p95 = por %p93, %p94
      %p96 = scmp.ne.s32.totalorder %s87, %s88
      %p97 = scmp.eq.s32.totalorder %s35, 0
      %p98 = por %p96, %p97
      %p99 = scmp.ne.s32.totalorder %s87, %s88
      %p100 = scmp.eq.s32.totalorder %s36, 1
      %p101 = por %p99, %p100
      %p103 = scmp.ne.s32.totalorder %s88, %s102
      %p104 = scmp.eq.s32.totalorder %s36, 0
      %p105 = por %p103, %p104
      %s107 = sadd.s32 %s106, 1
      %p110 = scmp.eq.s32.totalorder %s30, 1
      %p111 = scmp.ne.s32.totalorder %s106, %s108
      %p112 = scmp.eq.s32.totalorder %s30, 0
      %p113 = por %p111, %p112
      %p114 = scmp.ne.s32.totalorder %s106, %s108
      %p115 = scmp.eq.s32.totalorder %s35, 1
      %p116 = por %p114, %p115
      %p117 = scmp.ne.s32.totalorder %s108, %s109
      %p118 = scmp.eq.s32.totalorder %s35, 0
      %p119 = por %p117, %p118
      %p120 = scmp.ne.s32.totalorder %s108, %s109
      %p121 = scmp.eq.s32.totalorder %s36, 1
      %p122 = por %p120, %p121
      %p124 = scmp.ne.s32.totalorder %s109, %s123
      %p125 = scmp.eq.s32.totalorder %s36, 0
      %p126 = por %p124, %p125
      %s128 = sadd.s32 %s127, 1
      %p131 = scmp.eq.s32.totalorder %s30, 1
      %p132 = scmp.ne.s32.totalorder %s127, %s129
      %p133 = scmp.eq.s32.totalorder %s30, 0
      %p134 = por %p132, %p133
      %p135 = scmp.ne.s32.totalorder %s127, %s129
      %p136 = scmp.eq.s32.totalorder %s35, 1
      %p137 = por %p135, %p136
      %p138 = scmp.ne.s32.totalorder %s129, %s130
      %p139 = scmp.eq.s32.totalorder %s35, 0
      %p140 = por %p138, %p139
      %p141 = scmp.ne.s32.totalorder %s129, %s130
      %p142 = scmp.eq.s32.totalorder %s36, 1
      %p143 = por %p141, %p142
      %p145 = scmp.ne.s32.totalorder %s130, %s144
      %p146 = scmp.eq.s32.totalorder %s36, 0
      %p147 = por %p145, %p146
      %s149 = sadd.s32 %s148, 1
      %p152 = scmp.eq.s32.totalorder %s30, 1
      %p153 = scmp.ne.s32.totalorder %s148, %s150
      %p154 = scmp.eq.s32.totalorder %s30, 0
      %p155 = por %p153, %p154
      %p156 = scmp.ne.s32.totalorder %s148, %s150
      %p157 = scmp.eq.s32.totalorder %s35, 1
      %p158 = por %p156, %p157
      %p159 = scmp.ne.s32.totalorder %s150, %s151
      %p160 = scmp.eq.s32.totalorder %s35, 0
      %p161 = por %p159, %p160
      %p162 = scmp.ne.s32.totalorder %s150, %s151
      %p163 = scmp.eq.s32.totalorder %s36, 1
      %p164 = por %p162, %p163
      %p166 = scmp.ne.s32.totalorder %s151, %s165
      %p167 = scmp.eq.s32.totalorder %s36, 0
      %p168 = por %p166, %p167
      %s170 = sadd.s32 %s169, 1
      %p173 = scmp.eq.s32.totalorder %s30, 1
      %p174 = scmp.ne.s32.totalorder %s169, %s171
      %p175 = scmp.eq.s32.totalorder %s30, 0
      %p176 = por %p174, %p175
      %p177 = scmp.ne.s32.totalorder %s169, %s171
      %p178 = scmp.eq.s32.totalorder %s35, 1
      %p179 = por %p177, %p178
      %p180 = scmp.ne.s32.totalorder %s171, %s172
      %p181 = scmp.eq.s32.totalorder %s35, 0
      %p182 = por %p180, %p181
      %p183 = scmp.ne.s32.totalorder %s171, %s172
      %p184 = scmp.eq.s32.totalorder %s36, 1
      %p185 = por %p183, %p184
      %p187 = scmp.ne.s32.totalorder %s172, %s186
      %p188 = scmp.eq.s32.totalorder %s36, 0
      %p189 = por %p187, %p188
      %s191 = sadd.s32 %s190, 1
      %p194 = scmp.eq.s32.totalorder %s30, 1
      %p195 = scmp.ne.s32.totalorder %s190, %s192
      %p196 = scmp.eq.s32.totalorder %s30, 0
      %p197 = por %p195, %p196
      %p198 = scmp.ne.s32.totalorder %s190, %s192
      %p199 = scmp.eq.s32.totalorder %s35, 1
      %p200 = por %p198, %p199
      %p201 = scmp.ne.s32.totalorder %s192, %s193
      %p202 = scmp.eq.s32.totalorder %s35, 0
      %p203 = por %p201, %p202
      %p204 = scmp.ne.s32.totalorder %s192, %s193
      %p205 = scmp.eq.s32.totalorder %s36, 1
      %p206 = por %p204, %p205
      %p208 = scmp.ne.s32.totalorder %s193, %s207
      %p209 = scmp.eq.s32.totalorder %s36, 0
      %p210 = por %p208, %p209
      %s212 = sadd.s32 %s211, 1
      %p215 = scmp.eq.s32.totalorder %s30, 1
      %p216 = scmp.ne.s32.totalorder %s211, %s213
      %p217 = scmp.eq.s32.totalorder %s30, 0
      %p218 = por %p216, %p217
      %p219 = scmp.ne.s32.totalorder %s211, %s213
      %p220 = scmp.eq.s32.totalorder %s35, 1
      %p221 = por %p219, %p220
      %p222 = scmp.ne.s32.totalorder %s213, %s214
      %p223 = scmp.eq.s32.totalorder %s35, 0
      %p224 = por %p222, %p223
      %p225 = scmp.ne.s32.totalorder %s213, %s214
      %p226 = scmp.eq.s32.totalorder %s36, 1
      %p227 = por %p225, %p226
      %p229 = scmp.ne.s32.totalorder %s214, %s228
      %p230 = scmp.eq.s32.totalorder %s36, 0
      %p231 = por %p229, %p230
      %s233 = sadd.s32 %s232, 1
      %p236 = scmp.eq.s32.totalorder %s30, 1
      %p237 = scmp.ne.s32.totalorder %s232, %s234
      %p238 = scmp.eq.s32.totalorder %s30, 0
      %p239 = por %p237, %p238
      %p240 = scmp.ne.s32.totalorder %s232, %s234
      %p241 = scmp.eq.s32.totalorder %s35, 1
      %p242 = por %p240, %p241
      %p243 = scmp.ne.s32.totalorder %s234, %s235
      %p244 = scmp.eq.s32.totalorder %s35, 0
      %p245 = por %p243, %p244
      %p246 = scmp.ne.s32.totalorder %s234, %s235
      %p247 = scmp.eq.s32.totalorder %s36, 1
      %p248 = por %p246, %p247
      %p250 = scmp.ne.s32.totalorder %s235, %s249
      %p251 = scmp.eq.s32.totalorder %s36, 0
      %p252 = por %p250, %p251
      %s254 = sadd.s32 %s253, 1
      %p257 = scmp.eq.s32.totalorder %s30, 1
      %p258 = scmp.ne.s32.totalorder %s253, %s255
      %p259 = scmp.eq.s32.totalorder %s30, 0
      %p260 = por %p258, %p259
      %p261 = scmp.ne.s32.totalorder %s253, %s255
      %p262 = scmp.eq.s32.totalorder %s35, 1
      %p263 = por %p261, %p262
      %p264 = scmp.ne.s32.totalorder %s255, %s256
      %p265 = scmp.eq.s32.totalorder %s35, 0
      %p266 = por %p264, %p265
      %p267 = scmp.ne.s32.totalorder %s255, %s256
      %p268 = scmp.eq.s32.totalorder %s36, 1
      %p269 = por %p267, %p268
      %p271 = scmp.ne.s32.totalorder %s256, %s270
      %p272 = scmp.eq.s32.totalorder %s36, 0
      %p273 = por %p271, %p272
      %s275 = sadd.s32 %s274, 1
      %p278 = scmp.eq.s32.totalorder %s30, 1
      %p279 = scmp.ne.s32.totalorder %s274, %s276
      %p280 = scmp.eq.s32.totalorder %s30, 0
      %p281 = por %p279, %p280
      %p282 = scmp.ne.s32.totalorder %s274, %s276
      %p283 = scmp.eq.s32.totalorder %s35, 1
      %p284 = por %p282, %p283
      %p285 = scmp.ne.s32.totalorder %s276, %s277
      %p286 = scmp.eq.s32.totalorder %s35, 0
      %p287 = por %p285, %p286
      %p288 = scmp.ne.s32.totalorder %s276, %s277
      %p289 = scmp.eq.s32.totalorder %s36, 1
      %p290 = por %p288, %p289
      %p292 = scmp.ne.s32.totalorder %s277, %s291
      %p293 = scmp.eq.s32.totalorder %s36, 0
      %p294 = por %p292, %p293
      %s296 = sadd.s32 %s295, 1
      %p299 = scmp.eq.s32.totalorder %s30, 1
      %p300 = scmp.ne.s32.totalorder %s295, %s297
      %p301 = scmp.eq.s32.totalorder %s30, 0
      %p302 = por %p300, %p301
      %p303 = scmp.ne.s32.totalorder %s295, %s297
      %p304 = scmp.eq.s32.totalorder %s35, 1
      %p305 = por %p303, %p304
      %p306 = scmp.ne.s32.totalorder %s297, %s298
      %p307 = scmp.eq.s32.totalorder %s35, 0
      %p308 = por %p306, %p307
      %p309 = scmp.ne.s32.totalorder %s297, %s298
      %p310 = scmp.eq.s32.totalorder %s36, 1
      %p311 = por %p309, %p310
      %p313 = scmp.ne.s32.totalorder %s298, %s312
      %p314 = scmp.eq.s32.totalorder %s36, 0
      %p315 = por %p313, %p314
      %s317 = sadd.s32 %s316, 1
      %p320 = scmp.eq.s32.totalorder %s30, 1
      %p321 = scmp.ne.s32.totalorder %s316, %s318
      %p322 = scmp.eq.s32.totalorder %s30, 0
      %p323 = por %p321, %p322
      %p324 = scmp.ne.s32.totalorder %s316, %s318
      %p325 = scmp.eq.s32.totalorder %s35, 1
      %p326 = por %p324, %p325
      %p327 = scmp.ne.s32.totalorder %s318, %s319
      %p328 = scmp.eq.s32.totalorder %s35, 0
      %p329 = por %p327, %p328
      %p330 = scmp.ne.s32.totalorder %s318, %s319
      %p331 = scmp.eq.s32.totalorder %s36, 1
      %p332 = por %p330, %p331
      %p334 = scmp.ne.s32.totalorder %s319, %s333
      %p335 = scmp.eq.s32.totalorder %s36, 0
      %p336 = por %p334, %p335
      %s338 = sadd.s32 %s337, 1
      %p341 = scmp.eq.s32.totalorder %s30, 1
      %p342 = scmp.ne.s32.totalorder %s337, %s339
      %p343 = scmp.eq.s32.totalorder %s30, 0
      %p344 = por %p342, %p343
      %p345 = scmp.ne.s32.totalorder %s337, %s339
      %p346 = scmp.eq.s32.totalorder %s35, 1
      %p347 = por %p345, %p346
      %p348 = scmp.ne.s32.totalorder %s339, %s340
      %p349 = scmp.eq.s32.totalorder %s35, 0
      %p350 = por %p348, %p349
      %p351 = scmp.ne.s32.totalorder %s339, %s340
      %p352 = scmp.eq.s32.totalorder %s36, 1
      %p353 = por %p351, %p352
      %p355 = scmp.ne.s32.totalorder %s340, %s354
      %p356 = scmp.eq.s32.totalorder %s36, 0
      %p357 = por %p355, %p356
      %s359 = sadd.s32 %s358, 1
      %p362 = scmp.eq.s32.totalorder %s30, 1
      %p363 = scmp.ne.s32.totalorder %s358, %s360
      %p364 = scmp.eq.s32.totalorder %s30, 0
      %p365 = por %p363, %p364
      %p366 = scmp.ne.s32.totalorder %s358, %s360
      %p367 = scmp.eq.s32.totalorder %s35, 1
      %p368 = por %p366, %p367
      %p369 = scmp.ne.s32.totalorder %s360, %s361
      %p370 = scmp.eq.s32.totalorder %s35, 0
      %p371 = por %p369, %p370
      %p372 = scmp.ne.s32.totalorder %s360, %s361
      %p373 = scmp.eq.s32.totalorder %s36, 1
      %p374 = por %p372, %p373
      %p376 = scmp.ne.s32.totalorder %s361, %s375
      %p377 = scmp.eq.s32.totalorder %s36, 0
      %p378 = por %p376, %p377
      %s380 = sadd.s32 %s379, 1
      %p383 = scmp.eq.s32.totalorder %s30, 1
      %p384 = scmp.ne.s32.totalorder %s379, %s381
      %p385 = scmp.eq.s32.totalorder %s30, 0
      %p386 = por %p384, %p385
      %p387 = scmp.ne.s32.totalorder %s379, %s381
      %p388 = scmp.eq.s32.totalorder %s35, 1
      %p389 = por %p387, %p388
      %p390 = scmp.ne.s32.totalorder %s381, %s382
      %p391 = scmp.eq.s32.totalorder %s35, 0
      %p392 = por %p390, %p391
      %p393 = scmp.ne.s32.totalorder %s381, %s382
      %p394 = scmp.eq.s32.totalorder %s36, 1
      %p395 = por %p393, %p394
      %p397 = scmp.ne.s32.totalorder %s382, %s396
      %p398 = scmp.eq.s32.totalorder %s36, 0
      %p399 = por %p397, %p398
      %s400 = ssub.s32 %s30, %s37
      %p401 = scmp.eq.s32.totalorder %s400, 0
      %s403 = sadd.s32 %s402, 1
      %s404 = scalar_select %p401, %s402, %s403
      %p407 = pneg %p401
      %p408 = scmp.eq.s32.totalorder %s30, 1
      %p409 = por %p407, %p408
      %p410 = scmp.ne.s32.totalorder %s402, %s405
      %p411 = scmp.eq.s32.totalorder %s30, 0
      %p412 = por %p410, %p411
      %p413 = scmp.ne.s32.totalorder %s402, %s405
      %p414 = scmp.eq.s32.totalorder %s35, 1
      %p415 = por %p413, %p414
      %p416 = scmp.ne.s32.totalorder %s405, %s406
      %p417 = scmp.eq.s32.totalorder %s35, 0
      %p418 = por %p416, %p417
      %p419 = scmp.ne.s32.totalorder %s405, %s406
      %p420 = scmp.eq.s32.totalorder %s36, 1
      %p421 = por %p419, %p420
      %p423 = scmp.ne.s32.totalorder %s406, %s422
      %p424 = scmp.eq.s32.totalorder %s36, 0
      %p425 = por %p423, %p424
      %s426 = ssub.s32 %s30, %s37
      %p427 = scmp.eq.s32.totalorder %s426, 0
      %s429 = sadd.s32 %s428, 1
      %s430 = scalar_select %p427, %s428, %s429
      %p433 = pneg %p427
      %p434 = scmp.eq.s32.totalorder %s30, 1
      %p435 = por %p433, %p434
      %p436 = scmp.ne.s32.totalorder %s428, %s431
      %p437 = scmp.eq.s32.totalorder %s30, 0
      %p438 = por %p436, %p437
      %p439 = scmp.ne.s32.totalorder %s428, %s431
      %p440 = scmp.eq.s32.totalorder %s35, 1
      %p441 = por %p439, %p440
      %p442 = scmp.ne.s32.totalorder %s431, %s432
      %p443 = scmp.eq.s32.totalorder %s35, 0
      %p444 = por %p442, %p443
      %p445 = scmp.ne.s32.totalorder %s431, %s432
      %p446 = scmp.eq.s32.totalorder %s36, 1
      %p447 = por %p445, %p446
      %p449 = scmp.ne.s32.totalorder %s432, %s448
      %p450 = scmp.eq.s32.totalorder %s36, 0
      %p451 = por %p449, %p450
      %p452 = scmp.le.s32.totalorder 1, %s30
      %p453 = scmp.lt.s32.totalorder %s30, 3
      %p454 = pnand %p452, %p453
      %p455 = pneg %p454
      // Predicated region
      $region9: #{autoencoder_forward.1} parent=5 // pred_check
        _
      $region10: #{autoencoder_forward.1} parent=5 // pred_check_branch
        %457 = sbr.rel (%p454) target = $region12
      $region11: #{autoencoder_forward.1} parent=5 // pred_region
        %s458 = ssub.s32 %s30, 1
        // Predicated region
        $region13: #{autoencoder_forward.1} parent=11 // pred_check
          %p459 = pneg %p77
        $region14: #{autoencoder_forward.1} parent=11 // pred_check_branch
          %461 = sbr.rel (%p459) target = $region16
        $region15: #{autoencoder_forward.1} parent=11 // pred_region
          _
        $region16: #{autoencoder_forward.1} parent=11 // pred_fallthru
          _
        // Predicated region
        $region17: #{autoencoder_forward.1} parent=11 // pred_check
          %p462 = pneg %p98
        $region18: #{autoencoder_forward.1} parent=11 // pred_check_branch
          %464 = sbr.rel (%p462) target = $region20
        $region19: #{autoencoder_forward.1} parent=11 // pred_region
          _
        $region20: #{autoencoder_forward.1} parent=11 // pred_fallthru
          _
        // Predicated region
        $region21: #{autoencoder_forward.1} parent=11 // pred_check
          %p465 = pneg %p119
        $region22: #{autoencoder_forward.1} parent=11 // pred_check_branch
          %467 = sbr.rel (%p465) target = $region24
        $region23: #{autoencoder_forward.1} parent=11 // pred_region
          _
        $region24: #{autoencoder_forward.1} parent=11 // pred_fallthru
          _
        // Predicated region
        $region25: #{autoencoder_forward.1} parent=11 // pred_check
          %p468 = pneg %p140
        $region26: #{autoencoder_forward.1} parent=11 // pred_check_branch
          %470 = sbr.rel (%p468) target = $region28
        $region27: #{autoencoder_forward.1} parent=11 // pred_region
          _
        $region28: #{autoencoder_forward.1} parent=11 // pred_fallthru
          _
        // Predicated region
        $region29: #{autoencoder_forward.1} parent=11 // pred_check
          %p471 = pneg %p161
        $region30: #{autoencoder_forward.1} parent=11 // pred_check_branch
          %473 = sbr.rel (%p471) target = $region32
        $region31: #{autoencoder_forward.1} parent=11 // pred_region
          _
        $region32: #{autoencoder_forward.1} parent=11 // pred_fallthru
          _
        // Predicated region
        $region33: #{autoencoder_forward.1} parent=11 // pred_check
          %p474 = pneg %p182
        $region34: #{autoencoder_forward.1} parent=11 // pred_check_branch
          %476 = sbr.rel (%p474) target = $region36
        $region35: #{autoencoder_forward.1} parent=11 // pred_region
          _
        $region36: #{autoencoder_forward.1} parent=11 // pred_fallthru
          _
        // Predicated region
        $region37: #{autoencoder_forward.1} parent=11 // pred_check
          %p477 = pneg %p203
        $region38: #{autoencoder_forward.1} parent=11 // pred_check_branch
          %479 = sbr.rel (%p477) target = $region40
        $region39: #{autoencoder_forward.1} parent=11 // pred_region
          _
        $region40: #{autoencoder_forward.1} parent=11 // pred_fallthru
          _
        // Predicated region
        $region41: #{autoencoder_forward.1} parent=11 // pred_check
          %p480 = pneg %p224
        $region42: #{autoencoder_forward.1} parent=11 // pred_check_branch
          %482 = sbr.rel (%p480) target = $region44
        $region43: #{autoencoder_forward.1} parent=11 // pred_region
          _
        $region44: #{autoencoder_forward.1} parent=11 // pred_fallthru
          _
        // Predicated region
        $region45: #{autoencoder_forward.1} parent=11 // pred_check
          %p483 = pneg %p245
        $region46: #{autoencoder_forward.1} parent=11 // pred_check_branch
          %485 = sbr.rel (%p483) target = $region48
        $region47: #{autoencoder_forward.1} parent=11 // pred_region
          %s487 = ssub.s32 1024, 1024
          %488 = vsyncadd [#allocation3], %s487
          %s489 = sshll.u32 [#allocation2], 4
          %s490 = int_to_ptr.vmem [resolvable:$true] %s489
          %495 = dma.hbm_to_vmem [thread:$0]  %s9, 1024, %s490, [#allocation3], 64, 64, 4
        $region48: #{autoencoder_forward.1} parent=11 // pred_fallthru
          _
        // Predicated region
        $region49: #{autoencoder_forward.1} parent=11 // pred_check
          %p496 = pneg %p266
        $region50: #{autoencoder_forward.1} parent=11 // pred_check_branch
          %498 = sbr.rel (%p496) target = $region52
        $region51: #{autoencoder_forward.1} parent=11 // pred_region
          _
        $region52: #{autoencoder_forward.1} parent=11 // pred_fallthru
          _
        // Predicated region
        $region53: #{autoencoder_forward.1} parent=11 // pred_check
          %p499 = pneg %p287
        $region54: #{autoencoder_forward.1} parent=11 // pred_check_branch
          %501 = sbr.rel (%p499) target = $region56
        $region55: #{autoencoder_forward.1} parent=11 // pred_region
          %s503 = ssub.s32 1024, 1024
          %504 = vsyncadd [#allocation6], %s503
          %s505 = sshll.u32 [#allocation5], 4
          %s506 = int_to_ptr.vmem [resolvable:$true] %s505
          %511 = dma.hbm_to_vmem [thread:$0]  %s11, 1024, %s506, [#allocation6], 64, 64, 4
        $region56: #{autoencoder_forward.1} parent=11 // pred_fallthru
          _
        // Predicated region
        $region57: #{autoencoder_forward.1} parent=11 // pred_check
          %p512 = pneg %p308
        $region58: #{autoencoder_forward.1} parent=11 // pred_check_branch
          %514 = sbr.rel (%p512) target = $region60
        $region59: #{autoencoder_forward.1} parent=11 // pred_region
          _
        $region60: #{autoencoder_forward.1} parent=11 // pred_fallthru
          _
        // Predicated region
        $region61: #{autoencoder_forward.1} parent=11 // pred_check
          %p515 = pneg %p329
        $region62: #{autoencoder_forward.1} parent=11 // pred_check_branch
          %517 = sbr.rel (%p515) target = $region64
        $region63: #{autoencoder_forward.1} parent=11 // pred_region
          %s519 = ssub.s32 1024, 1024
          %520 = vsyncadd [#allocation6], %s519
          %s521 = sshll.u32 [#allocation7], 4
          %s522 = int_to_ptr.vmem [resolvable:$true] %s521
          %527 = dma.hbm_to_vmem [thread:$0]  %s13, 1024, %s522, [#allocation6], 64, 64, 4
        $region64: #{autoencoder_forward.1} parent=11 // pred_fallthru
          _
        // Predicated region
        $region65: #{autoencoder_forward.1} parent=11 // pred_check
          %p528 = pneg %p350
        $region66: #{autoencoder_forward.1} parent=11 // pred_check_branch
          %530 = sbr.rel (%p528) target = $region68
        $region67: #{autoencoder_forward.1} parent=11 // pred_region
          _
        $region68: #{autoencoder_forward.1} parent=11 // pred_fallthru
          _
        // Predicated region
        $region69: #{autoencoder_forward.1} parent=11 // pred_check
          %p531 = pneg %p371
        $region70: #{autoencoder_forward.1} parent=11 // pred_check_branch
          %533 = sbr.rel (%p531) target = $region72
        $region71: #{autoencoder_forward.1} parent=11 // pred_region
          _
        $region72: #{autoencoder_forward.1} parent=11 // pred_fallthru
          _
        // Predicated region
        $region73: #{autoencoder_forward.1} parent=11 // pred_check
          %p534 = pneg %p392
        $region74: #{autoencoder_forward.1} parent=11 // pred_check_branch
          %536 = sbr.rel (%p534) target = $region76
        $region75: #{autoencoder_forward.1} parent=11 // pred_region
          _
        $region76: #{autoencoder_forward.1} parent=11 // pred_fallthru
          _
      $region12: #{autoencoder_forward.1} parent=5 // pred_fallthru
        _
      %p537 = scmp.lt.s32.totalorder %s30, 2
      // Predicated region
      $region77: #{autoencoder_forward.1} parent=5 // pred_check
        %p538 = pneg %p537
      $region78: #{autoencoder_forward.1} parent=5 // pred_check_branch
        %540 = sbr.rel (%p538) target = $region80
      $region79: #{autoencoder_forward.1} parent=5 // pred_region
        // Predicated region
        $region81: #{autoencoder_forward.1} parent=79 // pred_check
          %p541 = pneg %p50
        $region82: #{autoencoder_forward.1} parent=79 // pred_check_branch
          %543 = sbr.rel (%p541) target = $region84
        $region83: #{autoencoder_forward.1} parent=79 // pred_region
          %s544 = smul.u32 2, %s30
          %p545 = scmp.lt.s32.totalorder %s544, 3
          %s546 = scalar_select %p545, %s544, 3
          %s547 = smul.addr %s546, 7
          %s548 = smul.addr %s547, 8
          %s549 = scalar_lea.vmem %s0, %s548
          %s550 = smul.u32 2, %s30
        $region84: #{autoencoder_forward.1} parent=79 // pred_fallthru
          _
      $region80: #{autoencoder_forward.1} parent=5 // pred_fallthru
        _
      %p551 = scmp.le.s32.totalorder 1, %s30
      %p552 = scmp.lt.s32.totalorder %s30, 3
      %p553 = pnand %p551, %p552
      %p554 = pneg %p553
      // Predicated region
      $region85: #{autoencoder_forward.1} parent=5 // pred_check
        _
      $region86: #{autoencoder_forward.1} parent=5 // pred_check_branch
        %556 = sbr.rel (%p553) target = $region88
      $region87: #{autoencoder_forward.1} parent=5 // pred_region
        %s557 = ssub.s32 %s30, 1
        // Predicated region
        $region89: #{autoencoder_forward.1} parent=87 // pred_check
          %p558 = pneg %p245
        $region90: #{autoencoder_forward.1} parent=87 // pred_check_branch
          %560 = sbr.rel (%p558) target = $region92
        $region91: #{autoencoder_forward.1} parent=87 // pred_region
          %561 = dma.done [#allocation3], 1024
        $region92: #{autoencoder_forward.1} parent=87 // pred_fallthru
          _
        // Predicated region
        $region93: #{autoencoder_forward.1} parent=87 // pred_check
          %p562 = pneg %p287
        $region94: #{autoencoder_forward.1} parent=87 // pred_check_branch
          %564 = sbr.rel (%p562) target = $region96
        $region95: #{autoencoder_forward.1} parent=87 // pred_region
          %565 = dma.done [#allocation6], 1024
        $region96: #{autoencoder_forward.1} parent=87 // pred_fallthru
          _
        // Predicated region
        $region97: #{autoencoder_forward.1} parent=87 // pred_check
          %p566 = pneg %p329
        $region98: #{autoencoder_forward.1} parent=87 // pred_check_branch
          %568 = sbr.rel (%p566) target = $region100
        $region99: #{autoencoder_forward.1} parent=87 // pred_region
          %569 = dma.done [#allocation6], 1024
        $region100: #{autoencoder_forward.1} parent=87 // pred_fallthru
          _
        %s570 = smul.u32 2, %s35
        %p571 = scmp.lt.s32.totalorder %s570, 3
        %s572 = scalar_select %p571, %s570, 3
        %s573 = smul.addr %s572, 7
        %s574 = smul.addr %s573, 8
        %s575 = scalar_lea.vmem %s0, %s574
        %p576 = pneg %p56
        %p577 = pneg %p53
        %p578 = pneg %p77
        %p579 = pneg %p74
        %p580 = pneg %p98
        %p581 = pneg %p95
        %p582 = pneg %p119
        %p583 = pneg %p116
        %p584 = pneg %p140
        %p585 = pneg %p137
        %p586 = pneg %p161
        %p587 = pneg %p158
        %p588 = pneg %p182
        %p589 = pneg %p179
        %p590 = pneg %p203
        %p591 = pneg %p200
        %p592 = pneg %p224
        %p593 = pneg %p221
        %p594 = pneg %p245
        %p595 = pneg %p242
        %p596 = pneg %p266
        %p597 = pneg %p263
        %p598 = pneg %p287
        %p599 = pneg %p284
        %p600 = pneg %p308
        %p601 = pneg %p305
        %p602 = pneg %p329
        %p603 = pneg %p326
        %p604 = pneg %p350
        %p605 = pneg %p347
        %p606 = pneg %p371
        %p607 = pneg %p368
        %p608 = pneg %p392
        %p609 = pneg %p389
        %p610 = pneg %p418
        %p611 = pneg %p415
        %s612 = smul.u32 2, %s35
        %p613 = scmp.lt.s32.totalorder %s612, 3
        %s614 = scalar_select %p613, %s612, 3
        %s615 = smul.addr %s614, 4
        %s616 = scalar_lea.vmem %s17, %s615
        %p617 = pneg %p444
        %p618 = pneg %p441
        %s619 = sand.u32 %s431, 1
        %s620 = scalar_lea.sflag [#allocation4], %s619
        %s621 = sand.u32 %s431, 1
        %s622 = smul.addr %s621, 112
        %s623 = scalar_lea.vmem [#allocation8], %s622
        %s624 = smul.u32 2, %s35
        %p625 = scmp.lt.s32.totalorder %s624, 3
        %s626 = scalar_select %p625, %s624, 3
        %s627 = smul.addr %s626, 7
        %s628 = smul.addr %s627, 8
        %s629 = scalar_lea.vmem %s0, %s628
        %s630 = smul.u32 2, %s35
        %s631 = smul.u32 2, %s35
        %p632 = scmp.lt.s32.totalorder %s631, 3
        %s633 = scalar_select %p632, %s631, 3
        %s634 = smul.addr %s633, 4
        %s635 = scalar_lea.vmem %s17, %s634
        %s636 = smul.u32 2, %s35
        %s637 = smul.u32 2, %s35
        %v639 = vld [vmem:[%s629] sm:$0xff]
        %v640 = vld [vmem:[%s629 + $0x8] sm:$0xff]
        %v641 = vld [vmem:[%s629 + $0x10] sm:$0xff]
        %v642 = vld [vmem:[%s629 + $0x18] sm:$0xff]
        %v643 = vld [vmem:[%s629 + $0x20] sm:$0xff]
        %v644 = vld [vmem:[%s629 + $0x28] sm:$0xff]
        %v645 = vld [vmem:[%s629 + $0x30] sm:$0xff]
        %v646 = vld [vmem:[%s629 + $0x38] sm:$0xff]
        %v647 = vld [vmem:[%s629 + $0x40] sm:$0xff]
        %v648 = vld [vmem:[%s629 + $0x48] sm:$0xff]
        %v649 = vld [vmem:[%s629 + $0x50] sm:$0xff]
        %v650 = vld [vmem:[%s629 + $0x58] sm:$0xff]
        %v651 = vld [vmem:[%s629 + $0x60] sm:$0xff]
        %v652 = vld [vmem:[%s629 + $0x68] sm:$0xff]
        %v653 = vpack.c.bf16 %v646, %v639
        %v654 = vpack.c.bf16 %v647, %v640
        %v655 = vpack.c.bf16 %v648, %v641
        %v656 = vpack.c.bf16 %v649, %v642
        %v657 = vpack.c.bf16 %v650, %v643
        %v658 = vpack.c.bf16 %v651, %v644
        %v659 = vpack.c.bf16 %v652, %v645
        %v660 = vld [vmem:[%s1] sm:$0xf]
        %v661 = vld [vmem:[%s1 + $0x4] sm:$0xf]
        %v662 = vld [vmem:[%s1 + $0x8] sm:$0xf]
        %v663 = vld [vmem:[%s1 + $0xc] sm:$0xf]
        %v664 = vld [vmem:[%s1 + $0x10] sm:$0xf]
        %v665 = vld [vmem:[%s1 + $0x14] sm:$0xf]
        %v666 = vld [vmem:[%s1 + $0x18] sm:$0xf]
        %v667 = vld [vmem:[%s1 + $0x1c] sm:$0xf]
        %v668 = vld [vmem:[%s1 + $0x20] sm:$0xf]
        %v669 = vld [vmem:[%s1 + $0x24] sm:$0xf]
        %v670 = vld [vmem:[%s1 + $0x28] sm:$0xf]
        %v671 = vld [vmem:[%s1 + $0x2c] sm:$0xf]
        %v672 = vld [vmem:[%s1 + $0x30] sm:$0xf]
        %v673 = vld [vmem:[%s1 + $0x34] sm:$0xf]
        %v674 = vld [vmem:[%s1 + $0x38] sm:$0xf]
        %v675 = vld [vmem:[%s1 + $0x3c] sm:$0xf]
        %v676 = vld [vmem:[%s1 + $0x40] sm:$0xf]
        %v677 = vld [vmem:[%s1 + $0x44] sm:$0xf]
        %v678 = vld [vmem:[%s1 + $0x48] sm:$0xf]
        %v679 = vld [vmem:[%s1 + $0x4c] sm:$0xf]
        %v680 = vld [vmem:[%s1 + $0x50] sm:$0xf]
        %v681 = vld [vmem:[%s1 + $0x54] sm:$0xf]
        %v682 = vld [vmem:[%s1 + $0x58] sm:$0xf]
        %v683 = vld [vmem:[%s1 + $0x5c] sm:$0xf]
        %v684 = vld [vmem:[%s1 + $0x60] sm:$0xf]
        %v685 = vld [vmem:[%s1 + $0x64] sm:$0xf]
        %v686 = vld [vmem:[%s1 + $0x68] sm:$0xf]
        %v687 = vld [vmem:[%s1 + $0x6c] sm:$0xf]
        %v688 = vld [vmem:[%s1 + $0x70] sm:$0xf]
        %v689 = vld [vmem:[%s1 + $0x74] sm:$0xf]
        %v690 = vld [vmem:[%s1 + $0x78] sm:$0xf]
        %v691 = vld [vmem:[%s1 + $0x7c] sm:$0xf]
        %v692 = vld [vmem:[%s1 + $0x80] sm:$0xf]
        %v693 = vld [vmem:[%s1 + $0x84] sm:$0xf]
        %v694 = vld [vmem:[%s1 + $0x88] sm:$0xf]
        %v695 = vld [vmem:[%s1 + $0x8c] sm:$0xf]
        %v696 = vld [vmem:[%s1 + $0x90] sm:$0xf]
        %v697 = vld [vmem:[%s1 + $0x94] sm:$0xf]
        %v698 = vld [vmem:[%s1 + $0x98] sm:$0xf]
        %v699 = vld [vmem:[%s1 + $0x9c] sm:$0xf]
        %v700 = vld [vmem:[%s1 + $0xa0] sm:$0xf]
        %v701 = vld [vmem:[%s1 + $0xa4] sm:$0xf]
        %v702 = vld [vmem:[%s1 + $0xa8] sm:$0xf]
        %v703 = vld [vmem:[%s1 + $0xac] sm:$0xf]
        %v704 = vld [vmem:[%s1 + $0xb0] sm:$0xf]
        %v705 = vld [vmem:[%s1 + $0xb4] sm:$0xf]
        %v706 = vld [vmem:[%s1 + $0xb8] sm:$0xf]
        %v707 = vld [vmem:[%s1 + $0xbc] sm:$0xf]
        %v708 = vld [vmem:[%s1 + $0xc0] sm:$0xf]
        %v709 = vld [vmem:[%s1 + $0xc4] sm:$0xf]
        %v710 = vld [vmem:[%s1 + $0xc8] sm:$0xf]
        %v711 = vld [vmem:[%s1 + $0xcc] sm:$0xf]
        %v712 = vld [vmem:[%s1 + $0xd0] sm:$0xf]
        %v713 = vld [vmem:[%s1 + $0xd4] sm:$0xf]
        %v714 = vld [vmem:[%s1 + $0xd8] sm:$0xf]
        %v715 = vld [vmem:[%s1 + $0xdc] sm:$0xf]
        %v716 = vld [vmem:[%s1 + $0xe0] sm:$0xf]
        %v717 = vld [vmem:[%s1 + $0xe4] sm:$0xf]
        %v718 = vld [vmem:[%s1 + $0xe8] sm:$0xf]
        %v719 = vld [vmem:[%s1 + $0xec] sm:$0xf]
        %v720 = vld [vmem:[%s1 + $0xf0] sm:$0xf]
        %v721 = vld [vmem:[%s1 + $0xf4] sm:$0xf]
        %v722 = vld [vmem:[%s1 + $0xf8] sm:$0xf]
        %v723 = vld [vmem:[%s1 + $0xfc] sm:$0xf]
        %v724 = vld [vmem:[%s1 + $0x100] sm:$0xf]
        %v725 = vld [vmem:[%s1 + $0x104] sm:$0xf]
        %v726 = vld [vmem:[%s1 + $0x108] sm:$0xf]
        %v727 = vld [vmem:[%s1 + $0x10c] sm:$0xf]
        %v728 = vld [vmem:[%s1 + $0x110] sm:$0xf]
        %v729 = vld [vmem:[%s1 + $0x114] sm:$0xf]
        %v730 = vld [vmem:[%s1 + $0x118] sm:$0xf]
        %v731 = vld [vmem:[%s1 + $0x11c] sm:$0xf]
        %v732 = vld [vmem:[%s1 + $0x120] sm:$0xf]
        %v733 = vld [vmem:[%s1 + $0x124] sm:$0xf]
        %v734 = vld [vmem:[%s1 + $0x128] sm:$0xf]
        %v735 = vld [vmem:[%s1 + $0x12c] sm:$0xf]
        %v736 = vld [vmem:[%s1 + $0x130] sm:$0xf]
        %v737 = vld [vmem:[%s1 + $0x134] sm:$0xf]
        %v738 = vld [vmem:[%s1 + $0x138] sm:$0xf]
        %v739 = vld [vmem:[%s1 + $0x13c] sm:$0xf]
        %v740 = vld [vmem:[%s1 + $0x140] sm:$0xf]
        %v741 = vld [vmem:[%s1 + $0x144] sm:$0xf]
        %v742 = vld [vmem:[%s1 + $0x148] sm:$0xf]
        %v743 = vld [vmem:[%s1 + $0x14c] sm:$0xf]
        %v744 = vld [vmem:[%s1 + $0x150] sm:$0xf]
        %v745 = vld [vmem:[%s1 + $0x154] sm:$0xf]
        %v746 = vld [vmem:[%s1 + $0x158] sm:$0xf]
        %v747 = vld [vmem:[%s1 + $0x15c] sm:$0xf]
        %v748 = vld [vmem:[%s1 + $0x160] sm:$0xf]
        %v749 = vld [vmem:[%s1 + $0x164] sm:$0xf]
        %v750 = vld [vmem:[%s1 + $0x168] sm:$0xf]
        %v751 = vld [vmem:[%s1 + $0x16c] sm:$0xf]
        %v752 = vld [vmem:[%s1 + $0x170] sm:$0xf]
        %v753 = vld [vmem:[%s1 + $0x174] sm:$0xf]
        %v754 = vld [vmem:[%s1 + $0x178] sm:$0xf]
        %v755 = vld [vmem:[%s1 + $0x17c] sm:$0xf]
        %v756 = vld [vmem:[%s1 + $0x180] sm:$0xf]
        %v757 = vld [vmem:[%s1 + $0x184] sm:$0xf]
        %v758 = vld [vmem:[%s2] sm:$0x1]
        %v760 = vlaneseq
        %v761 = vshrl.u32 %v760, 7
        %v762 = vsub.s32 0, %v761
        %v763 = vrot.slane %v758, %v762
        %v863 = vunpack.c.l.b16 %v660
        %v864 = vunpack.c.l.b16 %v661
        %v865 = vunpack.c.l.b16 %v662
        %v866 = vunpack.c.l.b16 %v663
        %v867 = vunpack.c.l.b16 %v664
        %v868 = vunpack.c.l.b16 %v665
        %v869 = vunpack.c.l.b16 %v666
        %v870 = vunpack.c.l.b16 %v667
        %v871 = vunpack.c.l.b16 %v668
        %v872 = vunpack.c.l.b16 %v669
        %v873 = vunpack.c.l.b16 %v670
        %v874 = vunpack.c.l.b16 %v671
        %v875 = vunpack.c.l.b16 %v672
        %v876 = vunpack.c.l.b16 %v673
        %v877 = vunpack.c.l.b16 %v674
        %v878 = vunpack.c.l.b16 %v675
        %v879 = vunpack.c.l.b16 %v676
        %v880 = vunpack.c.l.b16 %v677
        %v881 = vunpack.c.l.b16 %v678
        %v882 = vunpack.c.l.b16 %v679
        %v883 = vunpack.c.l.b16 %v680
        %v884 = vunpack.c.l.b16 %v681
        %v885 = vunpack.c.l.b16 %v682
        %v886 = vunpack.c.l.b16 %v683
        %v887 = vunpack.c.l.b16 %v684
        %v888 = vunpack.c.l.b16 %v685
        %v889 = vunpack.c.l.b16 %v686
        %v890 = vunpack.c.l.b16 %v687
        %v891 = vunpack.c.l.b16 %v688
        %v892 = vunpack.c.l.b16 %v689
        %v893 = vunpack.c.l.b16 %v690
        %v894 = vunpack.c.l.b16 %v691
        %v895 = vunpack.c.l.b16 %v692
        %v896 = vunpack.c.l.b16 %v693
        %v897 = vunpack.c.l.b16 %v694
        %v898 = vunpack.c.l.b16 %v695
        %v899 = vunpack.c.l.b16 %v696
        %v900 = vunpack.c.l.b16 %v697
        %v901 = vunpack.c.l.b16 %v698
        %v902 = vunpack.c.l.b16 %v699
        %v903 = vunpack.c.l.b16 %v700
        %v904 = vunpack.c.l.b16 %v701
        %v905 = vunpack.c.l.b16 %v702
        %v906 = vunpack.c.l.b16 %v703
        %v907 = vunpack.c.l.b16 %v704
        %v908 = vunpack.c.l.b16 %v705
        %v909 = vunpack.c.l.b16 %v706
        %v910 = vunpack.c.l.b16 %v707
        %v911 = vunpack.c.l.b16 %v708
        %v912 = vunpack.c.l.b16 %v709
        %v913 = vunpack.c.l.b16 %v710
        %v914 = vunpack.c.l.b16 %v711
        %v915 = vunpack.c.l.b16 %v712
        %v916 = vunpack.c.l.b16 %v713
        %v917 = vunpack.c.l.b16 %v714
        %v918 = vunpack.c.l.b16 %v715
        %v919 = vunpack.c.l.b16 %v716
        %v920 = vunpack.c.l.b16 %v717
        %v921 = vunpack.c.l.b16 %v718
        %v922 = vunpack.c.l.b16 %v719
        %v923 = vunpack.c.l.b16 %v720
        %v924 = vunpack.c.l.b16 %v721
        %v925 = vunpack.c.l.b16 %v722
        %v926 = vunpack.c.l.b16 %v723
        %v927 = vunpack.c.l.b16 %v724
        %v928 = vunpack.c.l.b16 %v725
        %v929 = vunpack.c.l.b16 %v726
        %v930 = vunpack.c.l.b16 %v727
        %v931 = vunpack.c.l.b16 %v728
        %v932 = vunpack.c.l.b16 %v729
        %v933 = vunpack.c.l.b16 %v730
        %v934 = vunpack.c.l.b16 %v731
        %v935 = vunpack.c.l.b16 %v732
        %v936 = vunpack.c.l.b16 %v733
        %v937 = vunpack.c.l.b16 %v734
        %v938 = vunpack.c.l.b16 %v735
        %v939 = vunpack.c.l.b16 %v736
        %v940 = vunpack.c.l.b16 %v737
        %v941 = vunpack.c.l.b16 %v738
        %v942 = vunpack.c.l.b16 %v739
        %v943 = vunpack.c.l.b16 %v740
        %v944 = vunpack.c.l.b16 %v741
        %v945 = vunpack.c.l.b16 %v742
        %v946 = vunpack.c.l.b16 %v743
        %v947 = vunpack.c.l.b16 %v744
        %v948 = vunpack.c.l.b16 %v745
        %v949 = vunpack.c.l.b16 %v746
        %v950 = vunpack.c.l.b16 %v747
        %v951 = vunpack.c.l.b16 %v748
        %v952 = vunpack.c.l.b16 %v749
        %v953 = vunpack.c.l.b16 %v750
        %v954 = vunpack.c.l.b16 %v751
        %v955 = vunpack.c.l.b16 %v752
        %v956 = vunpack.c.l.b16 %v753
        %v957 = vunpack.c.l.b16 %v754
        %v958 = vunpack.c.l.b16 %v755
        %v959 = vunpack.c.l.b16 %v756
        %v960 = vunpack.c.l.b16 %v757
        %v961 = vpack.c.b16 %v864, %v863
        %v962 = vpack.c.b16 %v866, %v865
        %v963 = vpack.c.b16 %v868, %v867
        %v964 = vpack.c.b16 %v870, %v869
        %v965 = vpack.c.b16 %v872, %v871
        %v966 = vpack.c.b16 %v874, %v873
        %v967 = vpack.c.b16 %v876, %v875
        %v968 = vpack.c.b16 %v878, %v877
        %v969 = vpack.c.b16 %v880, %v879
        %v970 = vpack.c.b16 %v882, %v881
        %v971 = vpack.c.b16 %v884, %v883
        %v972 = vpack.c.b16 %v886, %v885
        %v973 = vpack.c.b16 %v888, %v887
        %v974 = vpack.c.b16 %v890, %v889
        %v975 = vpack.c.b16 %v892, %v891
        %v976 = vpack.c.b16 %v894, %v893
        %v977 = vpack.c.b16 %v896, %v895
        %v978 = vpack.c.b16 %v898, %v897
        %v979 = vpack.c.b16 %v900, %v899
        %v980 = vpack.c.b16 %v902, %v901
        %v981 = vpack.c.b16 %v904, %v903
        %v982 = vpack.c.b16 %v906, %v905
        %v983 = vpack.c.b16 %v908, %v907
        %v984 = vpack.c.b16 %v910, %v909
        %v985 = vpack.c.b16 %v912, %v911
        %v986 = vpack.c.b16 %v914, %v913
        %v987 = vpack.c.b16 %v916, %v915
        %v988 = vpack.c.b16 %v918, %v917
        %v989 = vpack.c.b16 %v920, %v919
        %v990 = vpack.c.b16 %v922, %v921
        %v991 = vpack.c.b16 %v924, %v923
        %v992 = vpack.c.b16 %v926, %v925
        %v993 = vpack.c.b16 %v928, %v927
        %v994 = vpack.c.b16 %v930, %v929
        %v995 = vpack.c.b16 %v932, %v931
        %v996 = vpack.c.b16 %v934, %v933
        %v997 = vpack.c.b16 %v936, %v935
        %v998 = vpack.c.b16 %v938, %v937
        %v999 = vpack.c.b16 %v940, %v939
        %v1000 = vpack.c.b16 %v942, %v941
        %v1001 = vpack.c.b16 %v944, %v943
        %v1002 = vpack.c.b16 %v946, %v945
        %v1003 = vpack.c.b16 %v948, %v947
        %v1004 = vpack.c.b16 %v950, %v949
        %v1005 = vpack.c.b16 %v952, %v951
        %v1006 = vpack.c.b16 %v954, %v953
        %v1007 = vpack.c.b16 %v956, %v955
        %v1008 = vpack.c.b16 %v958, %v957
        %v1009 = vpack.c.b16 %v960, %v959
        %vm1059 = vcmask 130048
        %v1061 = vsel %vm1059, %v659, 0
        %1063 = vmatprep.subr.bf16.mxu0 0
        %1064 = vmatpush1.bf16.msra.mxu0 %v968
        %1065 = vmatprep.subr.bf16.mxu0 0
        %1066 = vmatpush1.bf16.msra.mxu0 %v967
        %1067 = vmatprep.subr.bf16.mxu0 0
        %1068 = vmatpush1.bf16.msra.mxu0 %v966
        %1069 = vmatprep.subr.bf16.mxu0 0
        %1070 = vmatpush1.bf16.msra.mxu0 %v965
        %1071 = vmatprep.subr.bf16.mxu0 0
        %1072 = vmatpush1.bf16.msra.mxu0 %v964
        %1073 = vmatprep.subr.bf16.mxu0 0
        %1074 = vmatpush1.bf16.msra.mxu0 %v963
        %1075 = vmatprep.subr.bf16.mxu0 0
        %1076 = vmatpush1.bf16.msra.mxu0 %v962
        %1077 = vmatprep.subr.bf16.mxu0 0
        %1078 = vmatpush1.bf16.msra.mxu0 %v961
        %1079 = vmatprep.subr.bf16.mxu0 0
        %1080 = vmatpush2.bf16.msra.mxu0 %v976
        %1081 = vmatprep.subr.bf16.mxu0 0
        %1082 = vmatpush2.bf16.msra.mxu0 %v975
        %1083 = vmatprep.subr.bf16.mxu0 0
        %1084 = vmatpush2.bf16.msra.mxu0 %v974
        %1085 = vmatprep.subr.bf16.mxu0 0
        %1086 = vmatpush2.bf16.msra.mxu0 %v973
        %1087 = vmatprep.subr.bf16.mxu0 0
        %1088 = vmatpush2.bf16.msra.mxu0 %v972
        %1089 = vmatprep.subr.bf16.mxu0 0
        %1090 = vmatpush2.bf16.msra.mxu0 %v971
        %1091 = vmatprep.subr.bf16.mxu0 0
        %1092 = vmatpush2.bf16.msra.mxu0 %v970
        %1093 = vmatprep.subr.bf16.mxu0 0
        %1094 = vmatpush2.bf16.msra.mxu0 %v969
        %1095 = vmatprep.mubr.bf16.mxu0 %v654
        %1096 = vmatmul.mubr.bf16.gmra.mxu0 %v653
        %v1097 = vpop.f32.mrf.mxu0
        %v1098 = vadd.f32 %v763, %v1097
        %v1099 = vpop.f32.mrf.mxu0
        %v1100 = vpop.f32.mrf.mxu0
        %v1101 = vadd.f32 %v763, %v1100
        %v1102 = vpop.f32.mrf.mxu0
        %1103 = vdwg.mxu0
        %1104 = vmatprep.subr.bf16.mxu0 0
        %1105 = vmatpush1.bf16.msra.mxu0 %v984
        %1106 = vmatprep.subr.bf16.mxu0 0
        %1107 = vmatpush1.bf16.msra.mxu0 %v983
        %1108 = vmatprep.subr.bf16.mxu0 0
        %1109 = vmatpush1.bf16.msra.mxu0 %v982
        %1110 = vmatprep.subr.bf16.mxu0 0
        %1111 = vmatpush1.bf16.msra.mxu0 %v981
        %1112 = vmatprep.subr.bf16.mxu0 0
        %1113 = vmatpush1.bf16.msra.mxu0 %v980
        %1114 = vmatprep.subr.bf16.mxu0 0
        %1115 = vmatpush1.bf16.msra.mxu0 %v979
        %1116 = vmatprep.subr.bf16.mxu0 0
        %1117 = vmatpush1.bf16.msra.mxu0 %v978
        %1118 = vmatprep.subr.bf16.mxu0 0
        %1119 = vmatpush1.bf16.msra.mxu0 %v977
        %1120 = vmatprep.subr.bf16.mxu0 0
        %1121 = vmatpush2.bf16.msra.mxu0 %v992
        %1122 = vmatprep.subr.bf16.mxu0 0
        %1123 = vmatpush2.bf16.msra.mxu0 %v991
        %1124 = vmatprep.subr.bf16.mxu0 0
        %1125 = vmatpush2.bf16.msra.mxu0 %v990
        %1126 = vmatprep.subr.bf16.mxu0 0
        %1127 = vmatpush2.bf16.msra.mxu0 %v989
        %1128 = vmatprep.subr.bf16.mxu0 0
        %1129 = vmatpush2.bf16.msra.mxu0 %v988
        %1130 = vmatprep.subr.bf16.mxu0 0
        %1131 = vmatpush2.bf16.msra.mxu0 %v987
        %1132 = vmatprep.subr.bf16.mxu0 0
        %1133 = vmatpush2.bf16.msra.mxu0 %v986
        %1134 = vmatprep.subr.bf16.mxu0 0
        %1135 = vmatpush2.bf16.msra.mxu0 %v985
        %1136 = vmatprep.mubr.bf16.mxu0 %v656
        %1137 = vmatmul.mubr.bf16.gmra.mxu0 %v655
        %v1138 = vpop.f32.mrf.mxu0
        %v1139 = vadd.f32 %v1098, %v1138
        %v1140 = vpop.f32.mrf.mxu0
        %v1141 = vpop.f32.mrf.mxu0
        %v1142 = vadd.f32 %v1101, %v1141
        %v1143 = vpop.f32.mrf.mxu0
        %1144 = vdwg.mxu0
        %1145 = vmatprep.subr.bf16.mxu0 0
        %1146 = vmatpush1.bf16.msra.mxu0 %v1000
        %1147 = vmatprep.subr.bf16.mxu0 0
        %1148 = vmatpush1.bf16.msra.mxu0 %v999
        %1149 = vmatprep.subr.bf16.mxu0 0
        %1150 = vmatpush1.bf16.msra.mxu0 %v998
        %1151 = vmatprep.subr.bf16.mxu0 0
        %1152 = vmatpush1.bf16.msra.mxu0 %v997
        %1153 = vmatprep.subr.bf16.mxu0 0
        %1154 = vmatpush1.bf16.msra.mxu0 %v996
        %1155 = vmatprep.subr.bf16.mxu0 0
        %1156 = vmatpush1.bf16.msra.mxu0 %v995
        %1157 = vmatprep.subr.bf16.mxu0 0
        %1158 = vmatpush1.bf16.msra.mxu0 %v994
        %1159 = vmatprep.subr.bf16.mxu0 0
        %1160 = vmatpush1.bf16.msra.mxu0 %v993
        %1161 = vmatprep.subr.bf16.mxu0 0
        %1162 = vmatpush2.bf16.msra.mxu0 %v1008
        %1163 = vmatprep.subr.bf16.mxu0 0
        %1164 = vmatpush2.bf16.msra.mxu0 %v1007
        %1165 = vmatprep.subr.bf16.mxu0 0
        %1166 = vmatpush2.bf16.msra.mxu0 %v1006
        %1167 = vmatprep.subr.bf16.mxu0 0
        %1168 = vmatpush2.bf16.msra.mxu0 %v1005
        %1169 = vmatprep.subr.bf16.mxu0 0
        %1170 = vmatpush2.bf16.msra.mxu0 %v1004
        %1171 = vmatprep.subr.bf16.mxu0 0
        %1172 = vmatpush2.bf16.msra.mxu0 %v1003
        %1173 = vmatprep.subr.bf16.mxu0 0
        %1174 = vmatpush2.bf16.msra.mxu0 %v1002
        %1175 = vmatprep.subr.bf16.mxu0 0
        %1176 = vmatpush2.bf16.msra.mxu0 %v1001
        %1177 = vmatprep.mubr.bf16.mxu0 %v658
        %1178 = vmatmul.mubr.bf16.gmra.mxu0 %v657
        %v1179 = vpop.f32.mrf.mxu0
        %v1180 = vadd.f32 %v1139, %v1179
        %v1181 = vpop.f32.mrf.mxu0
        %v1182 = vpop.f32.mrf.mxu0
        %v1183 = vadd.f32 %v1142, %v1182
        %v1184 = vpop.f32.mrf.mxu0
        %1185 = vdwg.mxu0
        %1186 = vmatprep.subr.bf16.mxu0 0
        %1187 = vmatpush1.bf16.msra.mxu0 0
        %1188 = vmatprep.subr.bf16.mxu0 0
        %1189 = vmatpush1.bf16.msra.mxu0 0
        %1190 = vmatprep.subr.bf16.mxu0 0
        %1191 = vmatpush1.bf16.msra.mxu0 0
        %1192 = vmatprep.subr.bf16.mxu0 0
        %1193 = vmatpush1.bf16.msra.mxu0 0
        %1194 = vmatprep.subr.bf16.mxu0 0
        %1195 = vmatpush1.bf16.msra.mxu0 0
        %1196 = vmatprep.subr.bf16.mxu0 0
        %1197 = vmatpush1.bf16.msra.mxu0 0
        %1198 = vmatprep.subr.bf16.mxu0 0
        %1199 = vmatpush1.bf16.msra.mxu0 0
        %1200 = vmatprep.subr.bf16.mxu0 0
        %1201 = vmatpush1.bf16.msra.mxu0 %v1009
        %1202 = vmatprep.subr.bf16.mxu0 0
        %1203 = vmatpush2.bf16.msra.mxu0 0
        %1204 = vmatprep.subr.bf16.mxu0 0
        %1205 = vmatpush2.bf16.msra.mxu0 0
        %1206 = vmatprep.subr.bf16.mxu0 0
        %1207 = vmatpush2.bf16.msra.mxu0 0
        %1208 = vmatprep.subr.bf16.mxu0 0
        %1209 = vmatpush2.bf16.msra.mxu0 0
        %1210 = vmatprep.subr.bf16.mxu0 0
        %1211 = vmatpush2.bf16.msra.mxu0 0
        %1212 = vmatprep.subr.bf16.mxu0 0
        %1213 = vmatpush2.bf16.msra.mxu0 0
        %1214 = vmatprep.subr.bf16.mxu0 0
        %1215 = vmatpush2.bf16.msra.mxu0 0
        %1216 = vmatprep.subr.bf16.mxu0 0
        %1217 = vmatpush2.bf16.msra.mxu0 0
        %1218 = vmatprep.mubr.bf16.mxu0 0
        %1219 = vmatmul.mubr.bf16.gmra.mxu0 %v1061
        %v1220 = vpop.f32.mrf.mxu0
        %v1221 = vadd.f32 %v1180, %v1220
        %v1222 = vpop.f32.mrf.mxu0
        %v1223 = vpop.f32.mrf.mxu0
        %v1224 = vadd.f32 %v1183, %v1223
        %v1225 = vpop.f32.mrf.mxu0
        %1226 = vdwg.mxu0
        %v1227 = vtanh.pop %v1221
        %v1228 = vtanh.pop %v1224
        %v1229 = vpack.c.bf16 %v1228, %v1227
        %v1230 = vld [vmem:[%s3] sm:$0xf]
        %v1231 = vld [vmem:[%s3 + $0x4] sm:$0xf]
        %v1232 = vld [vmem:[%s3 + $0x8] sm:$0xf]
        %v1233 = vld [vmem:[%s3 + $0xc] sm:$0xf]
        %v1234 = vld [vmem:[%s3 + $0x10] sm:$0xf]
        %v1235 = vld [vmem:[%s3 + $0x14] sm:$0xf]
        %v1236 = vld [vmem:[%s3 + $0x18] sm:$0xf]
        %v1237 = vld [vmem:[%s3 + $0x1c] sm:$0xf]
        %v1238 = vld [vmem:[%s3 + $0x20] sm:$0xf]
        %v1239 = vld [vmem:[%s3 + $0x24] sm:$0xf]
        %v1240 = vld [vmem:[%s3 + $0x28] sm:$0xf]
        %v1241 = vld [vmem:[%s3 + $0x2c] sm:$0xf]
        %v1242 = vld [vmem:[%s3 + $0x30] sm:$0xf]
        %v1243 = vld [vmem:[%s3 + $0x34] sm:$0xf]
        %v1244 = vld [vmem:[%s3 + $0x38] sm:$0xf]
        %v1245 = vld [vmem:[%s3 + $0x3c] sm:$0xf]
        %v1246 = vld [vmem:[%s4] sm:$0x1]
        %v1248 = vlaneseq
        %v1249 = vshrl.u32 %v1248, 7
        %v1250 = vsub.s32 0, %v1249
        %v1251 = vrot.slane %v1246, %v1250
        %v1269 = vunpack.c.l.b16 %v1230
        %v1270 = vunpack.c.l.b16 %v1231
        %v1271 = vunpack.c.l.b16 %v1232
        %v1272 = vunpack.c.l.b16 %v1233
        %v1273 = vunpack.c.l.b16 %v1234
        %v1274 = vunpack.c.l.b16 %v1235
        %v1275 = vunpack.c.l.b16 %v1236
        %v1276 = vunpack.c.l.b16 %v1237
        %v1277 = vunpack.c.l.b16 %v1238
        %v1278 = vunpack.c.l.b16 %v1239
        %v1279 = vunpack.c.l.b16 %v1240
        %v1280 = vunpack.c.l.b16 %v1241
        %v1281 = vunpack.c.l.b16 %v1242
        %v1282 = vunpack.c.l.b16 %v1243
        %v1283 = vunpack.c.l.b16 %v1244
        %v1284 = vunpack.c.l.b16 %v1245
        %v1285 = vpack.c.b16 %v1270, %v1269
        %v1286 = vpack.c.b16 %v1272, %v1271
        %v1287 = vpack.c.b16 %v1274, %v1273
        %v1288 = vpack.c.b16 %v1276, %v1275
        %v1289 = vpack.c.b16 %v1278, %v1277
        %v1290 = vpack.c.b16 %v1280, %v1279
        %v1291 = vpack.c.b16 %v1282, %v1281
        %v1292 = vpack.c.b16 %v1284, %v1283
        %1301 = vmatprep.subr.bf16.mxu0 0
        %1302 = vmatpush1.bf16.msra.mxu0 %v1292
        %1303 = vmatprep.subr.bf16.mxu0 0
        %1304 = vmatpush1.bf16.msra.mxu0 %v1291
        %1305 = vmatprep.subr.bf16.mxu0 0
        %1306 = vmatpush1.bf16.msra.mxu0 %v1290
        %1307 = vmatprep.subr.bf16.mxu0 0
        %1308 = vmatpush1.bf16.msra.mxu0 %v1289
        %1309 = vmatprep.subr.bf16.mxu0 0
        %1310 = vmatpush1.bf16.msra.mxu0 %v1288
        %1311 = vmatprep.subr.bf16.mxu0 0
        %1312 = vmatpush1.bf16.msra.mxu0 %v1287
        %1313 = vmatprep.subr.bf16.mxu0 0
        %1314 = vmatpush1.bf16.msra.mxu0 %v1286
        %1315 = vmatprep.subr.bf16.mxu0 0
        %1316 = vmatpush1.bf16.msra.mxu0 %v1285
        %1317 = vmatprep.subr.bf16.mxu0 0
        %1318 = vmatpush2.bf16.msra.mxu0 0
        %1319 = vmatprep.subr.bf16.mxu0 0
        %1320 = vmatpush2.bf16.msra.mxu0 0
        %1321 = vmatprep.subr.bf16.mxu0 0
        %1322 = vmatpush2.bf16.msra.mxu0 0
        %1323 = vmatprep.subr.bf16.mxu0 0
        %1324 = vmatpush2.bf16.msra.mxu0 0
        %1325 = vmatprep.subr.bf16.mxu0 0
        %1326 = vmatpush2.bf16.msra.mxu0 0
        %1327 = vmatprep.subr.bf16.mxu0 0
        %1328 = vmatpush2.bf16.msra.mxu0 0
        %1329 = vmatprep.subr.bf16.mxu0 0
        %1330 = vmatpush2.bf16.msra.mxu0 0
        %1331 = vmatprep.subr.bf16.mxu0 0
        %1332 = vmatpush2.bf16.msra.mxu0 0
        %1333 = vmatprep.mubr.bf16.mxu0 0
        %1334 = vmatmul.mubr.bf16.gmra.mxu0 %v1229
        %v1335 = vpop.f32.mrf.mxu0
        %v1336 = vadd.f32 %v1251, %v1335
        %v1337 = vpop.f32.mrf.mxu0
        %v1338 = vpop.f32.mrf.mxu0
        %v1339 = vadd.f32 %v1251, %v1338
        %v1340 = vpop.f32.mrf.mxu0
        %1341 = vdwg.mxu0
        %v1342 = vtanh.pop %v1336
        %v1343 = vtanh.pop %v1339
        %v1344 = vpack.c.bf16 %v1343, %v1342
        %v1345 = vld [vmem:[%s5] sm:$0xf]
        %v1346 = vld [vmem:[%s5 + $0x4] sm:$0xf]
        %v1347 = vld [vmem:[%s5 + $0x8] sm:$0xf]
        %v1348 = vld [vmem:[%s5 + $0xc] sm:$0xf]
        %v1349 = vld [vmem:[%s5 + $0x10] sm:$0xf]
        %v1350 = vld [vmem:[%s5 + $0x14] sm:$0xf]
        %v1351 = vld [vmem:[%s5 + $0x18] sm:$0xf]
        %v1352 = vld [vmem:[%s5 + $0x1c] sm:$0xf]
        %v1353 = vld [vmem:[%s5 + $0x20] sm:$0xf]
        %v1354 = vld [vmem:[%s5 + $0x24] sm:$0xf]
        %v1355 = vld [vmem:[%s5 + $0x28] sm:$0xf]
        %v1356 = vld [vmem:[%s5 + $0x2c] sm:$0xf]
        %v1357 = vld [vmem:[%s5 + $0x30] sm:$0xf]
        %v1358 = vld [vmem:[%s5 + $0x34] sm:$0xf]
        %v1359 = vld [vmem:[%s5 + $0x38] sm:$0xf]
        %v1360 = vld [vmem:[%s5 + $0x3c] sm:$0xf]
        %v1361 = vld [vmem:[%s6] sm:$0x1]
        %v1363 = vlaneseq
        %v1364 = vshrl.u32 %v1363, 7
        %v1365 = vsub.s32 0, %v1364
        %v1366 = vrot.slane %v1361, %v1365
        %v1384 = vunpack.c.l.b16 %v1345
        %v1385 = vunpack.c.l.b16 %v1346
        %v1386 = vunpack.c.l.b16 %v1347
        %v1387 = vunpack.c.l.b16 %v1348
        %v1388 = vunpack.c.l.b16 %v1349
        %v1389 = vunpack.c.l.b16 %v1350
        %v1390 = vunpack.c.l.b16 %v1351
        %v1391 = vunpack.c.l.b16 %v1352
        %v1392 = vunpack.c.l.b16 %v1353
        %v1393 = vunpack.c.l.b16 %v1354
        %v1394 = vunpack.c.l.b16 %v1355
        %v1395 = vunpack.c.l.b16 %v1356
        %v1396 = vunpack.c.l.b16 %v1357
        %v1397 = vunpack.c.l.b16 %v1358
        %v1398 = vunpack.c.l.b16 %v1359
        %v1399 = vunpack.c.l.b16 %v1360
        %v1400 = vpack.c.b16 %v1385, %v1384
        %v1401 = vpack.c.b16 %v1387, %v1386
        %v1402 = vpack.c.b16 %v1389, %v1388
        %v1403 = vpack.c.b16 %v1391, %v1390
        %v1404 = vpack.c.b16 %v1393, %v1392
        %v1405 = vpack.c.b16 %v1395, %v1394
        %v1406 = vpack.c.b16 %v1397, %v1396
        %v1407 = vpack.c.b16 %v1399, %v1398
        %1416 = vmatprep.subr.bf16.mxu0 0
        %1417 = vmatpush1.bf16.msra.mxu0 %v1407
        %1418 = vmatprep.subr.bf16.mxu0 0
        %1419 = vmatpush1.bf16.msra.mxu0 %v1406
        %1420 = vmatprep.subr.bf16.mxu0 0
        %1421 = vmatpush1.bf16.msra.mxu0 %v1405
        %1422 = vmatprep.subr.bf16.mxu0 0
        %1423 = vmatpush1.bf16.msra.mxu0 %v1404
        %1424 = vmatprep.subr.bf16.mxu0 0
        %1425 = vmatpush1.bf16.msra.mxu0 %v1403
        %1426 = vmatprep.subr.bf16.mxu0 0
        %1427 = vmatpush1.bf16.msra.mxu0 %v1402
        %1428 = vmatprep.subr.bf16.mxu0 0
        %1429 = vmatpush1.bf16.msra.mxu0 %v1401
        %1430 = vmatprep.subr.bf16.mxu0 0
        %1431 = vmatpush1.bf16.msra.mxu0 %v1400
        %1432 = vmatprep.subr.bf16.mxu0 0
        %1433 = vmatpush2.bf16.msra.mxu0 0
        %1434 = vmatprep.subr.bf16.mxu0 0
        %1435 = vmatpush2.bf16.msra.mxu0 0
        %1436 = vmatprep.subr.bf16.mxu0 0
        %1437 = vmatpush2.bf16.msra.mxu0 0
        %1438 = vmatprep.subr.bf16.mxu0 0
        %1439 = vmatpush2.bf16.msra.mxu0 0
        %1440 = vmatprep.subr.bf16.mxu0 0
        %1441 = vmatpush2.bf16.msra.mxu0 0
        %1442 = vmatprep.subr.bf16.mxu0 0
        %1443 = vmatpush2.bf16.msra.mxu0 0
        %1444 = vmatprep.subr.bf16.mxu0 0
        %1445 = vmatpush2.bf16.msra.mxu0 0
        %1446 = vmatprep.subr.bf16.mxu0 0
        %1447 = vmatpush2.bf16.msra.mxu0 0
        %1448 = vmatprep.mubr.bf16.mxu0 0
        %1449 = vmatmul.mubr.bf16.gmra.mxu0 %v1344
        %v1450 = vpop.f32.mrf.mxu0
        %v1451 = vadd.f32 %v1366, %v1450
        %v1452 = vpop.f32.mrf.mxu0
        %v1453 = vpop.f32.mrf.mxu0
        %v1454 = vadd.f32 %v1366, %v1453
        %v1455 = vpop.f32.mrf.mxu0
        %1456 = vdwg.mxu0
        %v1457 = vtanh.pop %v1451
        %v1458 = vtanh.pop %v1454
        %v1459 = vpack.c.bf16 %v1458, %v1457
        %v1460 = vld [vmem:[%s7] sm:$0xf]
        %v1461 = vld [vmem:[%s7 + $0x4] sm:$0xf]
        %v1462 = vld [vmem:[%s7 + $0x8] sm:$0xf]
        %v1463 = vld [vmem:[%s7 + $0xc] sm:$0xf]
        %v1464 = vld [vmem:[%s7 + $0x10] sm:$0xf]
        %v1465 = vld [vmem:[%s7 + $0x14] sm:$0xf]
        %v1466 = vld [vmem:[%s7 + $0x18] sm:$0xf]
        %v1467 = vld [vmem:[%s7 + $0x1c] sm:$0xf]
        %v1468 = vld [vmem:[%s7 + $0x20] sm:$0xf]
        %v1469 = vld [vmem:[%s7 + $0x24] sm:$0xf]
        %v1470 = vld [vmem:[%s7 + $0x28] sm:$0xf]
        %v1471 = vld [vmem:[%s7 + $0x2c] sm:$0xf]
        %v1472 = vld [vmem:[%s7 + $0x30] sm:$0xf]
        %v1473 = vld [vmem:[%s7 + $0x34] sm:$0xf]
        %v1474 = vld [vmem:[%s7 + $0x38] sm:$0xf]
        %v1475 = vld [vmem:[%s7 + $0x3c] sm:$0xf]
        %v1476 = vld [vmem:[%s8] sm:$0x1]
        %v1478 = vlaneseq
        %v1479 = vshrl.u32 %v1478, 7
        %v1480 = vsub.s32 0, %v1479
        %v1481 = vrot.slane %v1476, %v1480
        %v1499 = vunpack.c.l.b16 %v1460
        %v1500 = vunpack.c.l.b16 %v1461
        %v1501 = vunpack.c.l.b16 %v1462
        %v1502 = vunpack.c.l.b16 %v1463
        %v1503 = vunpack.c.l.b16 %v1464
        %v1504 = vunpack.c.l.b16 %v1465
        %v1505 = vunpack.c.l.b16 %v1466
        %v1506 = vunpack.c.l.b16 %v1467
        %v1507 = vunpack.c.l.b16 %v1468
        %v1508 = vunpack.c.l.b16 %v1469
        %v1509 = vunpack.c.l.b16 %v1470
        %v1510 = vunpack.c.l.b16 %v1471
        %v1511 = vunpack.c.l.b16 %v1472
        %v1512 = vunpack.c.l.b16 %v1473
        %v1513 = vunpack.c.l.b16 %v1474
        %v1514 = vunpack.c.l.b16 %v1475
        %v1515 = vpack.c.b16 %v1500, %v1499
        %v1516 = vpack.c.b16 %v1502, %v1501
        %v1517 = vpack.c.b16 %v1504, %v1503
        %v1518 = vpack.c.b16 %v1506, %v1505
        %v1519 = vpack.c.b16 %v1508, %v1507
        %v1520 = vpack.c.b16 %v1510, %v1509
        %v1521 = vpack.c.b16 %v1512, %v1511
        %v1522 = vpack.c.b16 %v1514, %v1513
        %1531 = vmatprep.subr.bf16.mxu0 0
        %1532 = vmatpush1.bf16.msra.mxu0 %v1522
        %1533 = vmatprep.subr.bf16.mxu0 0
        %1534 = vmatpush1.bf16.msra.mxu0 %v1521
        %1535 = vmatprep.subr.bf16.mxu0 0
        %1536 = vmatpush1.bf16.msra.mxu0 %v1520
        %1537 = vmatprep.subr.bf16.mxu0 0
        %1538 = vmatpush1.bf16.msra.mxu0 %v1519
        %1539 = vmatprep.subr.bf16.mxu0 0
        %1540 = vmatpush1.bf16.msra.mxu0 %v1518
        %1541 = vmatprep.subr.bf16.mxu0 0
        %1542 = vmatpush1.bf16.msra.mxu0 %v1517
        %1543 = vmatprep.subr.bf16.mxu0 0
        %1544 = vmatpush1.bf16.msra.mxu0 %v1516
        %1545 = vmatprep.subr.bf16.mxu0 0
        %1546 = vmatpush1.bf16.msra.mxu0 %v1515
        %1547 = vmatprep.subr.bf16.mxu0 0
        %1548 = vmatpush2.bf16.msra.mxu0 0
        %1549 = vmatprep.subr.bf16.mxu0 0
        %1550 = vmatpush2.bf16.msra.mxu0 0
        %1551 = vmatprep.subr.bf16.mxu0 0
        %1552 = vmatpush2.bf16.msra.mxu0 0
        %1553 = vmatprep.subr.bf16.mxu0 0
        %1554 = vmatpush2.bf16.msra.mxu0 0
        %1555 = vmatprep.subr.bf16.mxu0 0
        %1556 = vmatpush2.bf16.msra.mxu0 0
        %1557 = vmatprep.subr.bf16.mxu0 0
        %1558 = vmatpush2.bf16.msra.mxu0 0
        %1559 = vmatprep.subr.bf16.mxu0 0
        %1560 = vmatpush2.bf16.msra.mxu0 0
        %1561 = vmatprep.subr.bf16.mxu0 0
        %1562 = vmatpush2.bf16.msra.mxu0 0
        %1563 = vmatprep.mubr.bf16.mxu0 0
        %1564 = vmatmul.mubr.bf16.gmra.mxu0 %v1459
        %v1565 = vpop.f32.mrf.mxu0
        %v1566 = vadd.f32 %v1481, %v1565
        %v1567 = vpop.f32.mrf.mxu0
        %v1568 = vpop.f32.mrf.mxu0
        %v1569 = vadd.f32 %v1481, %v1568
        %v1570 = vpop.f32.mrf.mxu0
        %1571 = vdwg.mxu0
        %v1572 = vpack.c.bf16 %v1569, %v1566
        %v1574 = vunpack.c.l.b16 %v1572
        %v1575 = vunpack.c.h.b16 %v1572
        %v1576 = vpack.c.b16 %v1574, %v1574
        %v1577 = vpack.c.b16 %v1575, %v1575
        %1580 = vst [vmem:[%s635] sm:$0xf] %v1576
        %1581 = vst [vmem:[%s635 + $0x4] sm:$0xf] %v1577
        %v1582 = vld [vmem:[#allocation2] sm:$0xf]
        %v1583 = vld [vmem:[#allocation2 + $0x4] sm:$0xf]
        %v1584 = vld [vmem:[#allocation2 + $0x8] sm:$0xf]
        %v1585 = vld [vmem:[#allocation2 + $0xc] sm:$0xf]
        %v1586 = vld [vmem:[#allocation2 + $0x10] sm:$0xf]
        %v1587 = vld [vmem:[#allocation2 + $0x14] sm:$0xf]
        %v1588 = vld [vmem:[#allocation2 + $0x18] sm:$0xf]
        %v1589 = vld [vmem:[#allocation2 + $0x1c] sm:$0xf]
        %v1590 = vld [vmem:[#allocation2 + $0x20] sm:$0xf]
        %v1591 = vld [vmem:[#allocation2 + $0x24] sm:$0xf]
        %v1592 = vld [vmem:[#allocation2 + $0x28] sm:$0xf]
        %v1593 = vld [vmem:[#allocation2 + $0x2c] sm:$0xf]
        %v1594 = vld [vmem:[#allocation2 + $0x30] sm:$0xf]
        %v1595 = vld [vmem:[#allocation2 + $0x34] sm:$0xf]
        %v1596 = vld [vmem:[#allocation2 + $0x38] sm:$0xf]
        %v1597 = vld [vmem:[#allocation2 + $0x3c] sm:$0xf]
        %v1598 = vld [vmem:[%s10] sm:$0x1]
        %v1600 = vlaneseq
        %v1601 = vshrl.u32 %v1600, 7
        %v1602 = vsub.s32 0, %v1601
        %v1603 = vrot.slane %v1598, %v1602
        %v1621 = vunpack.c.l.b16 %v1582
        %v1622 = vunpack.c.l.b16 %v1583
        %v1623 = vunpack.c.l.b16 %v1584
        %v1624 = vunpack.c.l.b16 %v1585
        %v1625 = vunpack.c.l.b16 %v1586
        %v1626 = vunpack.c.l.b16 %v1587
        %v1627 = vunpack.c.l.b16 %v1588
        %v1628 = vunpack.c.l.b16 %v1589
        %v1629 = vunpack.c.l.b16 %v1590
        %v1630 = vunpack.c.l.b16 %v1591
        %v1631 = vunpack.c.l.b16 %v1592
        %v1632 = vunpack.c.l.b16 %v1593
        %v1633 = vunpack.c.l.b16 %v1594
        %v1634 = vunpack.c.l.b16 %v1595
        %v1635 = vunpack.c.l.b16 %v1596
        %v1636 = vunpack.c.l.b16 %v1597
        %v1637 = vpack.c.b16 %v1622, %v1621
        %v1638 = vpack.c.b16 %v1624, %v1623
        %v1639 = vpack.c.b16 %v1626, %v1625
        %v1640 = vpack.c.b16 %v1628, %v1627
        %v1641 = vpack.c.b16 %v1630, %v1629
        %v1642 = vpack.c.b16 %v1632, %v1631
        %v1643 = vpack.c.b16 %v1634, %v1633
        %v1644 = vpack.c.b16 %v1636, %v1635
        %1653 = vmatprep.subr.bf16.mxu0 0
        %1654 = vmatpush1.bf16.msra.mxu0 %v1644
        %1655 = vmatprep.subr.bf16.mxu0 0
        %1656 = vmatpush1.bf16.msra.mxu0 %v1643
        %1657 = vmatprep.subr.bf16.mxu0 0
        %1658 = vmatpush1.bf16.msra.mxu0 %v1642
        %1659 = vmatprep.subr.bf16.mxu0 0
        %1660 = vmatpush1.bf16.msra.mxu0 %v1641
        %1661 = vmatprep.subr.bf16.mxu0 0
        %1662 = vmatpush1.bf16.msra.mxu0 %v1640
        %1663 = vmatprep.subr.bf16.mxu0 0
        %1664 = vmatpush1.bf16.msra.mxu0 %v1639
        %1665 = vmatprep.subr.bf16.mxu0 0
        %1666 = vmatpush1.bf16.msra.mxu0 %v1638
        %1667 = vmatprep.subr.bf16.mxu0 0
        %1668 = vmatpush1.bf16.msra.mxu0 %v1637
        %1669 = vmatprep.subr.bf16.mxu0 0
        %1670 = vmatpush2.bf16.msra.mxu0 0
        %1671 = vmatprep.subr.bf16.mxu0 0
        %1672 = vmatpush2.bf16.msra.mxu0 0
        %1673 = vmatprep.subr.bf16.mxu0 0
        %1674 = vmatpush2.bf16.msra.mxu0 0
        %1675 = vmatprep.subr.bf16.mxu0 0
        %1676 = vmatpush2.bf16.msra.mxu0 0
        %1677 = vmatprep.subr.bf16.mxu0 0
        %1678 = vmatpush2.bf16.msra.mxu0 0
        %1679 = vmatprep.subr.bf16.mxu0 0
        %1680 = vmatpush2.bf16.msra.mxu0 0
        %1681 = vmatprep.subr.bf16.mxu0 0
        %1682 = vmatpush2.bf16.msra.mxu0 0
        %1683 = vmatprep.subr.bf16.mxu0 0
        %1684 = vmatpush2.bf16.msra.mxu0 0
        %1685 = vmatprep.mubr.bf16.mxu0 0
        %1686 = vmatmul.mubr.bf16.gmra.mxu0 %v1572
        %v1687 = vpop.f32.mrf.mxu0
        %v1688 = vadd.f32 %v1603, %v1687
        %v1689 = vpop.f32.mrf.mxu0
        %v1690 = vpop.f32.mrf.mxu0
        %v1691 = vadd.f32 %v1603, %v1690
        %v1692 = vpop.f32.mrf.mxu0
        %1693 = vdwg.mxu0
        %v1694 = vtanh.pop %v1688
        %v1695 = vtanh.pop %v1691
        %v1696 = vpack.c.bf16 %v1695, %v1694
        %v1697 = vld [vmem:[#allocation5] sm:$0xf]
        %v1698 = vld [vmem:[#allocation5 + $0x4] sm:$0xf]
        %v1699 = vld [vmem:[#allocation5 + $0x8] sm:$0xf]
        %v1700 = vld [vmem:[#allocation5 + $0xc] sm:$0xf]
        %v1701 = vld [vmem:[#allocation5 + $0x10] sm:$0xf]
        %v1702 = vld [vmem:[#allocation5 + $0x14] sm:$0xf]
        %v1703 = vld [vmem:[#allocation5 + $0x18] sm:$0xf]
        %v1704 = vld [vmem:[#allocation5 + $0x1c] sm:$0xf]
        %v1705 = vld [vmem:[#allocation5 + $0x20] sm:$0xf]
        %v1706 = vld [vmem:[#allocation5 + $0x24] sm:$0xf]
        %v1707 = vld [vmem:[#allocation5 + $0x28] sm:$0xf]
        %v1708 = vld [vmem:[#allocation5 + $0x2c] sm:$0xf]
        %v1709 = vld [vmem:[#allocation5 + $0x30] sm:$0xf]
        %v1710 = vld [vmem:[#allocation5 + $0x34] sm:$0xf]
        %v1711 = vld [vmem:[#allocation5 + $0x38] sm:$0xf]
        %v1712 = vld [vmem:[#allocation5 + $0x3c] sm:$0xf]
        %v1713 = vld [vmem:[%s12] sm:$0x1]
        %v1715 = vlaneseq
        %v1716 = vshrl.u32 %v1715, 7
        %v1717 = vsub.s32 0, %v1716
        %v1718 = vrot.slane %v1713, %v1717
        %v1736 = vunpack.c.l.b16 %v1697
        %v1737 = vunpack.c.l.b16 %v1698
        %v1738 = vunpack.c.l.b16 %v1699
        %v1739 = vunpack.c.l.b16 %v1700
        %v1740 = vunpack.c.l.b16 %v1701
        %v1741 = vunpack.c.l.b16 %v1702
        %v1742 = vunpack.c.l.b16 %v1703
        %v1743 = vunpack.c.l.b16 %v1704
        %v1744 = vunpack.c.l.b16 %v1705
        %v1745 = vunpack.c.l.b16 %v1706
        %v1746 = vunpack.c.l.b16 %v1707
        %v1747 = vunpack.c.l.b16 %v1708
        %v1748 = vunpack.c.l.b16 %v1709
        %v1749 = vunpack.c.l.b16 %v1710
        %v1750 = vunpack.c.l.b16 %v1711
        %v1751 = vunpack.c.l.b16 %v1712
        %v1752 = vpack.c.b16 %v1737, %v1736
        %v1753 = vpack.c.b16 %v1739, %v1738
        %v1754 = vpack.c.b16 %v1741, %v1740
        %v1755 = vpack.c.b16 %v1743, %v1742
        %v1756 = vpack.c.b16 %v1745, %v1744
        %v1757 = vpack.c.b16 %v1747, %v1746
        %v1758 = vpack.c.b16 %v1749, %v1748
        %v1759 = vpack.c.b16 %v1751, %v1750
        %1768 = vmatprep.subr.bf16.mxu0 0
        %1769 = vmatpush1.bf16.msra.mxu0 %v1759
        %1770 = vmatprep.subr.bf16.mxu0 0
        %1771 = vmatpush1.bf16.msra.mxu0 %v1758
        %1772 = vmatprep.subr.bf16.mxu0 0
        %1773 = vmatpush1.bf16.msra.mxu0 %v1757
        %1774 = vmatprep.subr.bf16.mxu0 0
        %1775 = vmatpush1.bf16.msra.mxu0 %v1756
        %1776 = vmatprep.subr.bf16.mxu0 0
        %1777 = vmatpush1.bf16.msra.mxu0 %v1755
        %1778 = vmatprep.subr.bf16.mxu0 0
        %1779 = vmatpush1.bf16.msra.mxu0 %v1754
        %1780 = vmatprep.subr.bf16.mxu0 0
        %1781 = vmatpush1.bf16.msra.mxu0 %v1753
        %1782 = vmatprep.subr.bf16.mxu0 0
        %1783 = vmatpush1.bf16.msra.mxu0 %v1752
        %1784 = vmatprep.subr.bf16.mxu0 0
        %1785 = vmatpush2.bf16.msra.mxu0 0
        %1786 = vmatprep.subr.bf16.mxu0 0
        %1787 = vmatpush2.bf16.msra.mxu0 0
        %1788 = vmatprep.subr.bf16.mxu0 0
        %1789 = vmatpush2.bf16.msra.mxu0 0
        %1790 = vmatprep.subr.bf16.mxu0 0
        %1791 = vmatpush2.bf16.msra.mxu0 0
        %1792 = vmatprep.subr.bf16.mxu0 0
        %1793 = vmatpush2.bf16.msra.mxu0 0
        %1794 = vmatprep.subr.bf16.mxu0 0
        %1795 = vmatpush2.bf16.msra.mxu0 0
        %1796 = vmatprep.subr.bf16.mxu0 0
        %1797 = vmatpush2.bf16.msra.mxu0 0
        %1798 = vmatprep.subr.bf16.mxu0 0
        %1799 = vmatpush2.bf16.msra.mxu0 0
        %1800 = vmatprep.mubr.bf16.mxu0 0
        %1801 = vmatmul.mubr.bf16.gmra.mxu0 %v1696
        %v1802 = vpop.f32.mrf.mxu0
        %v1803 = vadd.f32 %v1718, %v1802
        %v1804 = vpop.f32.mrf.mxu0
        %v1805 = vpop.f32.mrf.mxu0
        %v1806 = vadd.f32 %v1718, %v1805
        %v1807 = vpop.f32.mrf.mxu0
        %1808 = vdwg.mxu0
        %v1809 = vtanh.pop %v1803
        %v1810 = vtanh.pop %v1806
        %v1811 = vpack.c.bf16 %v1810, %v1809
        %v1812 = vld [vmem:[#allocation7] sm:$0xf]
        %v1813 = vld [vmem:[#allocation7 + $0x4] sm:$0xf]
        %v1814 = vld [vmem:[#allocation7 + $0x8] sm:$0xf]
        %v1815 = vld [vmem:[#allocation7 + $0xc] sm:$0xf]
        %v1816 = vld [vmem:[#allocation7 + $0x10] sm:$0xf]
        %v1817 = vld [vmem:[#allocation7 + $0x14] sm:$0xf]
        %v1818 = vld [vmem:[#allocation7 + $0x18] sm:$0xf]
        %v1819 = vld [vmem:[#allocation7 + $0x1c] sm:$0xf]
        %v1820 = vld [vmem:[#allocation7 + $0x20] sm:$0xf]
        %v1821 = vld [vmem:[#allocation7 + $0x24] sm:$0xf]
        %v1822 = vld [vmem:[#allocation7 + $0x28] sm:$0xf]
        %v1823 = vld [vmem:[#allocation7 + $0x2c] sm:$0xf]
        %v1824 = vld [vmem:[#allocation7 + $0x30] sm:$0xf]
        %v1825 = vld [vmem:[#allocation7 + $0x34] sm:$0xf]
        %v1826 = vld [vmem:[#allocation7 + $0x38] sm:$0xf]
        %v1827 = vld [vmem:[#allocation7 + $0x3c] sm:$0xf]
        %v1828 = vld [vmem:[%s14] sm:$0x1]
        %v1830 = vlaneseq
        %v1831 = vshrl.u32 %v1830, 7
        %v1832 = vsub.s32 0, %v1831
        %v1833 = vrot.slane %v1828, %v1832
        %v1851 = vunpack.c.l.b16 %v1812
        %v1852 = vunpack.c.l.b16 %v1813
        %v1853 = vunpack.c.l.b16 %v1814
        %v1854 = vunpack.c.l.b16 %v1815
        %v1855 = vunpack.c.l.b16 %v1816
        %v1856 = vunpack.c.l.b16 %v1817
        %v1857 = vunpack.c.l.b16 %v1818
        %v1858 = vunpack.c.l.b16 %v1819
        %v1859 = vunpack.c.l.b16 %v1820
        %v1860 = vunpack.c.l.b16 %v1821
        %v1861 = vunpack.c.l.b16 %v1822
        %v1862 = vunpack.c.l.b16 %v1823
        %v1863 = vunpack.c.l.b16 %v1824
        %v1864 = vunpack.c.l.b16 %v1825
        %v1865 = vunpack.c.l.b16 %v1826
        %v1866 = vunpack.c.l.b16 %v1827
        %v1867 = vpack.c.b16 %v1852, %v1851
        %v1868 = vpack.c.b16 %v1854, %v1853
        %v1869 = vpack.c.b16 %v1856, %v1855
        %v1870 = vpack.c.b16 %v1858, %v1857
        %v1871 = vpack.c.b16 %v1860, %v1859
        %v1872 = vpack.c.b16 %v1862, %v1861
        %v1873 = vpack.c.b16 %v1864, %v1863
        %v1874 = vpack.c.b16 %v1866, %v1865
        %1883 = vmatprep.subr.bf16.mxu0 0
        %1884 = vmatpush1.bf16.msra.mxu0 %v1874
        %1885 = vmatprep.subr.bf16.mxu0 0
        %1886 = vmatpush1.bf16.msra.mxu0 %v1873
        %1887 = vmatprep.subr.bf16.mxu0 0
        %1888 = vmatpush1.bf16.msra.mxu0 %v1872
        %1889 = vmatprep.subr.bf16.mxu0 0
        %1890 = vmatpush1.bf16.msra.mxu0 %v1871
        %1891 = vmatprep.subr.bf16.mxu0 0
        %1892 = vmatpush1.bf16.msra.mxu0 %v1870
        %1893 = vmatprep.subr.bf16.mxu0 0
        %1894 = vmatpush1.bf16.msra.mxu0 %v1869
        %1895 = vmatprep.subr.bf16.mxu0 0
        %1896 = vmatpush1.bf16.msra.mxu0 %v1868
        %1897 = vmatprep.subr.bf16.mxu0 0
        %1898 = vmatpush1.bf16.msra.mxu0 %v1867
        %1899 = vmatprep.subr.bf16.mxu0 0
        %1900 = vmatpush2.bf16.msra.mxu0 0
        %1901 = vmatprep.subr.bf16.mxu0 0
        %1902 = vmatpush2.bf16.msra.mxu0 0
        %1903 = vmatprep.subr.bf16.mxu0 0
        %1904 = vmatpush2.bf16.msra.mxu0 0
        %1905 = vmatprep.subr.bf16.mxu0 0
        %1906 = vmatpush2.bf16.msra.mxu0 0
        %1907 = vmatprep.subr.bf16.mxu0 0
        %1908 = vmatpush2.bf16.msra.mxu0 0
        %1909 = vmatprep.subr.bf16.mxu0 0
        %1910 = vmatpush2.bf16.msra.mxu0 0
        %1911 = vmatprep.subr.bf16.mxu0 0
        %1912 = vmatpush2.bf16.msra.mxu0 0
        %1913 = vmatprep.subr.bf16.mxu0 0
        %1914 = vmatpush2.bf16.msra.mxu0 0
        %1915 = vmatprep.mubr.bf16.mxu0 0
        %1916 = vmatmul.mubr.bf16.gmra.mxu0 %v1811
        %v1917 = vpop.f32.mrf.mxu0
        %v1918 = vadd.f32 %v1833, %v1917
        %v1919 = vpop.f32.mrf.mxu0
        %v1920 = vpop.f32.mrf.mxu0
        %v1921 = vadd.f32 %v1833, %v1920
        %v1922 = vpop.f32.mrf.mxu0
        %1923 = vdwg.mxu0
        %v1924 = vtanh.pop %v1918
        %v1925 = vtanh.pop %v1921
        %v1926 = vpack.c.bf16 %v1925, %v1924
        %v1927 = vld [vmem:[%s15] sm:$0xff]
        %v1928 = vld [vmem:[%s15 + $0x8] sm:$0xff]
        %v1929 = vld [vmem:[%s15 + $0x10] sm:$0xff]
        %v1930 = vld [vmem:[%s15 + $0x18] sm:$0xf]
        %v1931 = vld [vmem:[%s15 + $0x1c] sm:$0xff]
        %v1932 = vld [vmem:[%s15 + $0x24] sm:$0xff]
        %v1933 = vld [vmem:[%s15 + $0x2c] sm:$0xff]
        %v1934 = vld [vmem:[%s15 + $0x34] sm:$0xf]
        %v1935 = vld [vmem:[%s15 + $0x38] sm:$0xff]
        %v1936 = vld [vmem:[%s15 + $0x40] sm:$0xff]
        %v1937 = vld [vmem:[%s15 + $0x48] sm:$0xff]
        %v1938 = vld [vmem:[%s15 + $0x50] sm:$0xf]
        %v1939 = vld [vmem:[%s15 + $0x54] sm:$0xff]
        %v1940 = vld [vmem:[%s15 + $0x5c] sm:$0xff]
        %v1941 = vld [vmem:[%s15 + $0x64] sm:$0xff]
        %v1942 = vld [vmem:[%s15 + $0x6c] sm:$0xf]
        %v1943 = vld [vmem:[%s15 + $0x70] sm:$0xff]
        %v1944 = vld [vmem:[%s15 + $0x78] sm:$0xff]
        %v1945 = vld [vmem:[%s15 + $0x80] sm:$0xff]
        %v1946 = vld [vmem:[%s15 + $0x88] sm:$0xf]
        %v1947 = vld [vmem:[%s15 + $0x8c] sm:$0xff]
        %v1948 = vld [vmem:[%s15 + $0x94] sm:$0xff]
        %v1949 = vld [vmem:[%s15 + $0x9c] sm:$0xff]
        %v1950 = vld [vmem:[%s15 + $0xa4] sm:$0xf]
        %v1951 = vld [vmem:[%s15 + $0xa8] sm:$0xff]
        %v1952 = vld [vmem:[%s15 + $0xb0] sm:$0xff]
        %v1953 = vld [vmem:[%s15 + $0xb8] sm:$0xff]
        %v1954 = vld [vmem:[%s15 + $0xc0] sm:$0xf]
        %v1955 = vld [vmem:[%s15 + $0xc4] sm:$0xff]
        %v1956 = vld [vmem:[%s15 + $0xcc] sm:$0xff]
        %v1957 = vld [vmem:[%s15 + $0xd4] sm:$0xff]
        %v1958 = vld [vmem:[%s15 + $0xdc] sm:$0xf]
        %v1959 = vld [vmem:[%s15 + $0xe0] sm:$0xff]
        %v1960 = vld [vmem:[%s15 + $0xe8] sm:$0xff]
        %v1961 = vld [vmem:[%s15 + $0xf0] sm:$0xff]
        %v1962 = vld [vmem:[%s15 + $0xf8] sm:$0xf]
        %v1963 = vld [vmem:[%s15 + $0xfc] sm:$0xff]
        %v1964 = vld [vmem:[%s15 + $0x104] sm:$0xff]
        %v1965 = vld [vmem:[%s15 + $0x10c] sm:$0xff]
        %v1966 = vld [vmem:[%s15 + $0x114] sm:$0xf]
        %v1967 = vld [vmem:[%s15 + $0x118] sm:$0xff]
        %v1968 = vld [vmem:[%s15 + $0x120] sm:$0xff]
        %v1969 = vld [vmem:[%s15 + $0x128] sm:$0xff]
        %v1970 = vld [vmem:[%s15 + $0x130] sm:$0xf]
        %v1971 = vld [vmem:[%s15 + $0x134] sm:$0xff]
        %v1972 = vld [vmem:[%s15 + $0x13c] sm:$0xff]
        %v1973 = vld [vmem:[%s15 + $0x144] sm:$0xff]
        %v1974 = vld [vmem:[%s15 + $0x14c] sm:$0xf]
        %v1975 = vld [vmem:[%s15 + $0x150] sm:$0xff]
        %v1976 = vld [vmem:[%s15 + $0x158] sm:$0xff]
        %v1977 = vld [vmem:[%s15 + $0x160] sm:$0xff]
        %v1978 = vld [vmem:[%s15 + $0x168] sm:$0xf]
        %v1979 = vld [vmem:[%s15 + $0x16c] sm:$0xff]
        %v1980 = vld [vmem:[%s15 + $0x174] sm:$0xff]
        %v1981 = vld [vmem:[%s15 + $0x17c] sm:$0xff]
        %v1982 = vld [vmem:[%s15 + $0x184] sm:$0xf]
        %v1983 = vld [vmem:[%s15 + $0x188] sm:$0xff]
        %v1984 = vld [vmem:[%s15 + $0x190] sm:$0xff]
        %v1985 = vld [vmem:[%s15 + $0x198] sm:$0xff]
        %v1986 = vld [vmem:[%s15 + $0x1a0] sm:$0xf]
        %v1987 = vld [vmem:[%s15 + $0x1a4] sm:$0xff]
        %v1988 = vld [vmem:[%s15 + $0x1ac] sm:$0xff]
        %v1989 = vld [vmem:[%s15 + $0x1b4] sm:$0xff]
        %v1990 = vld [vmem:[%s15 + $0x1bc] sm:$0xf]
        %v1991 = vld [vmem:[%s16] sm:$0x7f]
        %v1993 = vlaneseq
        %v1994 = vshrl.u32 %v1993, 7
        %v1995 = vsub.s32 0, %v1994
        %v1996 = vrot.slane %v1991, %v1995
        %v1997 = vlaneseq
        %v1998 = vshrl.u32 %v1997, 7
        %v1999 = vsub.s32 1, %v1998
        %v2000 = vrot.slane %v1991, %v1999
        %v2001 = vlaneseq
        %v2002 = vshrl.u32 %v2001, 7
        %v2003 = vsub.s32 2, %v2002
        %v2004 = vrot.slane %v1991, %v2003
        %v2005 = vlaneseq
        %v2006 = vshrl.u32 %v2005, 7
        %v2007 = vsub.s32 3, %v2006
        %v2008 = vrot.slane %v1991, %v2007
        %v2009 = vlaneseq
        %v2010 = vshrl.u32 %v2009, 7
        %v2011 = vsub.s32 4, %v2010
        %v2012 = vrot.slane %v1991, %v2011
        %v2013 = vlaneseq
        %v2014 = vshrl.u32 %v2013, 7
        %v2015 = vsub.s32 5, %v2014
        %v2016 = vrot.slane %v1991, %v2015
        %v2017 = vlaneseq
        %v2018 = vshrl.u32 %v2017, 7
        %v2019 = vsub.s32 6, %v2018
        %v2020 = vrot.slane %v1991, %v2019
        %v2092 = vunpack.c.l.b16 %v1927
        %v2093 = vunpack.c.h.b16 %v1927
        %v2094 = vunpack.c.l.b16 %v1928
        %v2095 = vunpack.c.h.b16 %v1928
        %v2096 = vunpack.c.l.b16 %v1929
        %v2097 = vunpack.c.h.b16 %v1929
        %v2098 = vunpack.c.l.b16 %v1930
        %v2099 = vunpack.c.l.b16 %v1931
        %v2100 = vunpack.c.h.b16 %v1931
        %v2101 = vunpack.c.l.b16 %v1932
        %v2102 = vunpack.c.h.b16 %v1932
        %v2103 = vunpack.c.l.b16 %v1933
        %v2104 = vunpack.c.h.b16 %v1933
        %v2105 = vunpack.c.l.b16 %v1934
        %v2106 = vunpack.c.l.b16 %v1935
        %v2107 = vunpack.c.h.b16 %v1935
        %v2108 = vunpack.c.l.b16 %v1936
        %v2109 = vunpack.c.h.b16 %v1936
        %v2110 = vunpack.c.l.b16 %v1937
        %v2111 = vunpack.c.h.b16 %v1937
        %v2112 = vunpack.c.l.b16 %v1938
        %v2113 = vunpack.c.l.b16 %v1939
        %v2114 = vunpack.c.h.b16 %v1939
        %v2115 = vunpack.c.l.b16 %v1940
        %v2116 = vunpack.c.h.b16 %v1940
        %v2117 = vunpack.c.l.b16 %v1941
        %v2118 = vunpack.c.h.b16 %v1941
        %v2119 = vunpack.c.l.b16 %v1942
        %v2120 = vunpack.c.l.b16 %v1943
        %v2121 = vunpack.c.h.b16 %v1943
        %v2122 = vunpack.c.l.b16 %v1944
        %v2123 = vunpack.c.h.b16 %v1944
        %v2124 = vunpack.c.l.b16 %v1945
        %v2125 = vunpack.c.h.b16 %v1945
        %v2126 = vunpack.c.l.b16 %v1946
        %v2127 = vunpack.c.l.b16 %v1947
        %v2128 = vunpack.c.h.b16 %v1947
        %v2129 = vunpack.c.l.b16 %v1948
        %v2130 = vunpack.c.h.b16 %v1948
        %v2131 = vunpack.c.l.b16 %v1949
        %v2132 = vunpack.c.h.b16 %v1949
        %v2133 = vunpack.c.l.b16 %v1950
        %v2134 = vunpack.c.l.b16 %v1951
        %v2135 = vunpack.c.h.b16 %v1951
        %v2136 = vunpack.c.l.b16 %v1952
        %v2137 = vunpack.c.h.b16 %v1952
        %v2138 = vunpack.c.l.b16 %v1953
        %v2139 = vunpack.c.h.b16 %v1953
        %v2140 = vunpack.c.l.b16 %v1954
        %v2141 = vunpack.c.l.b16 %v1955
        %v2142 = vunpack.c.h.b16 %v1955
        %v2143 = vunpack.c.l.b16 %v1956
        %v2144 = vunpack.c.h.b16 %v1956
        %v2145 = vunpack.c.l.b16 %v1957
        %v2146 = vunpack.c.h.b16 %v1957
        %v2147 = vunpack.c.l.b16 %v1958
        %v2148 = vunpack.c.l.b16 %v1959
        %v2149 = vunpack.c.h.b16 %v1959
        %v2150 = vunpack.c.l.b16 %v1960
        %v2151 = vunpack.c.h.b16 %v1960
        %v2152 = vunpack.c.l.b16 %v1961
        %v2153 = vunpack.c.h.b16 %v1961
        %v2154 = vunpack.c.l.b16 %v1962
        %v2155 = vunpack.c.l.b16 %v1963
        %v2156 = vunpack.c.h.b16 %v1963
        %v2157 = vunpack.c.l.b16 %v1964
        %v2158 = vunpack.c.h.b16 %v1964
        %v2159 = vunpack.c.l.b16 %v1965
        %v2160 = vunpack.c.h.b16 %v1965
        %v2161 = vunpack.c.l.b16 %v1966
        %v2162 = vunpack.c.l.b16 %v1967
        %v2163 = vunpack.c.h.b16 %v1967
        %v2164 = vunpack.c.l.b16 %v1968
        %v2165 = vunpack.c.h.b16 %v1968
        %v2166 = vunpack.c.l.b16 %v1969
        %v2167 = vunpack.c.h.b16 %v1969
        %v2168 = vunpack.c.l.b16 %v1970
        %v2169 = vunpack.c.l.b16 %v1971
        %v2170 = vunpack.c.h.b16 %v1971
        %v2171 = vunpack.c.l.b16 %v1972
        %v2172 = vunpack.c.h.b16 %v1972
        %v2173 = vunpack.c.l.b16 %v1973
        %v2174 = vunpack.c.h.b16 %v1973
        %v2175 = vunpack.c.l.b16 %v1974
        %v2176 = vunpack.c.l.b16 %v1975
        %v2177 = vunpack.c.h.b16 %v1975
        %v2178 = vunpack.c.l.b16 %v1976
        %v2179 = vunpack.c.h.b16 %v1976
        %v2180 = vunpack.c.l.b16 %v1977
        %v2181 = vunpack.c.h.b16 %v1977
        %v2182 = vunpack.c.l.b16 %v1978
        %v2183 = vunpack.c.l.b16 %v1979
        %v2184 = vunpack.c.h.b16 %v1979
        %v2185 = vunpack.c.l.b16 %v1980
        %v2186 = vunpack.c.h.b16 %v1980
        %v2187 = vunpack.c.l.b16 %v1981
        %v2188 = vunpack.c.h.b16 %v1981
        %v2189 = vunpack.c.l.b16 %v1982
        %v2190 = vunpack.c.l.b16 %v1983
        %v2191 = vunpack.c.h.b16 %v1983
        %v2192 = vunpack.c.l.b16 %v1984
        %v2193 = vunpack.c.h.b16 %v1984
        %v2194 = vunpack.c.l.b16 %v1985
        %v2195 = vunpack.c.h.b16 %v1985
        %v2196 = vunpack.c.l.b16 %v1986
        %v2197 = vunpack.c.l.b16 %v1987
        %v2198 = vunpack.c.h.b16 %v1987
        %v2199 = vunpack.c.l.b16 %v1988
        %v2200 = vunpack.c.h.b16 %v1988
        %v2201 = vunpack.c.l.b16 %v1989
        %v2202 = vunpack.c.h.b16 %v1989
        %v2203 = vunpack.c.l.b16 %v1990
        %v2204 = vpack.c.b16 %v2099, %v2092
        %v2205 = vpack.c.b16 %v2100, %v2093
        %v2206 = vpack.c.b16 %v2101, %v2094
        %v2207 = vpack.c.b16 %v2102, %v2095
        %v2208 = vpack.c.b16 %v2103, %v2096
        %v2209 = vpack.c.b16 %v2104, %v2097
        %v2210 = vpack.c.b16 %v2105, %v2098
        %v2211 = vpack.c.b16 %v2113, %v2106
        %v2212 = vpack.c.b16 %v2114, %v2107
        %v2213 = vpack.c.b16 %v2115, %v2108
        %v2214 = vpack.c.b16 %v2116, %v2109
        %v2215 = vpack.c.b16 %v2117, %v2110
        %v2216 = vpack.c.b16 %v2118, %v2111
        %v2217 = vpack.c.b16 %v2119, %v2112
        %v2218 = vpack.c.b16 %v2127, %v2120
        %v2219 = vpack.c.b16 %v2128, %v2121
        %v2220 = vpack.c.b16 %v2129, %v2122
        %v2221 = vpack.c.b16 %v2130, %v2123
        %v2222 = vpack.c.b16 %v2131, %v2124
        %v2223 = vpack.c.b16 %v2132, %v2125
        %v2224 = vpack.c.b16 %v2133, %v2126
        %v2225 = vpack.c.b16 %v2141, %v2134
        %v2226 = vpack.c.b16 %v2142, %v2135
        %v2227 = vpack.c.b16 %v2143, %v2136
        %v2228 = vpack.c.b16 %v2144, %v2137
        %v2229 = vpack.c.b16 %v2145, %v2138
        %v2230 = vpack.c.b16 %v2146, %v2139
        %v2231 = vpack.c.b16 %v2147, %v2140
        %v2232 = vpack.c.b16 %v2155, %v2148
        %v2233 = vpack.c.b16 %v2156, %v2149
        %v2234 = vpack.c.b16 %v2157, %v2150
        %v2235 = vpack.c.b16 %v2158, %v2151
        %v2236 = vpack.c.b16 %v2159, %v2152
        %v2237 = vpack.c.b16 %v2160, %v2153
        %v2238 = vpack.c.b16 %v2161, %v2154
        %v2239 = vpack.c.b16 %v2169, %v2162
        %v2240 = vpack.c.b16 %v2170, %v2163
        %v2241 = vpack.c.b16 %v2171, %v2164
        %v2242 = vpack.c.b16 %v2172, %v2165
        %v2243 = vpack.c.b16 %v2173, %v2166
        %v2244 = vpack.c.b16 %v2174, %v2167
        %v2245 = vpack.c.b16 %v2175, %v2168
        %v2246 = vpack.c.b16 %v2183, %v2176
        %v2247 = vpack.c.b16 %v2184, %v2177
        %v2248 = vpack.c.b16 %v2185, %v2178
        %v2249 = vpack.c.b16 %v2186, %v2179
        %v2250 = vpack.c.b16 %v2187, %v2180
        %v2251 = vpack.c.b16 %v2188, %v2181
        %v2252 = vpack.c.b16 %v2189, %v2182
        %v2253 = vpack.c.b16 %v2197, %v2190
        %v2254 = vpack.c.b16 %v2198, %v2191
        %v2255 = vpack.c.b16 %v2199, %v2192
        %v2256 = vpack.c.b16 %v2200, %v2193
        %v2257 = vpack.c.b16 %v2201, %v2194
        %v2258 = vpack.c.b16 %v2202, %v2195
        %v2259 = vpack.c.b16 %v2203, %v2196
        %2316 = vmatprep.subr.bf16.mxu0 %v2254
        %2317 = vmatpush1.bf16.msra.mxu0 %v2253
        %2318 = vmatprep.subr.bf16.mxu0 %v2247
        %2319 = vmatpush1.bf16.msra.mxu0 %v2246
        %2320 = vmatprep.subr.bf16.mxu0 %v2240
        %2321 = vmatpush1.bf16.msra.mxu0 %v2239
        %2322 = vmatprep.subr.bf16.mxu0 %v2233
        %2323 = vmatpush1.bf16.msra.mxu0 %v2232
        %2324 = vmatprep.subr.bf16.mxu0 %v2226
        %2325 = vmatpush1.bf16.msra.mxu0 %v2225
        %2326 = vmatprep.subr.bf16.mxu0 %v2219
        %2327 = vmatpush1.bf16.msra.mxu0 %v2218
        %2328 = vmatprep.subr.bf16.mxu0 %v2212
        %2329 = vmatpush1.bf16.msra.mxu0 %v2211
        %2330 = vmatprep.subr.bf16.mxu0 %v2205
        %2331 = vmatpush1.bf16.msra.mxu0 %v2204
        %2332 = vmatprep.subr.bf16.mxu0 0
        %2333 = vmatpush2.bf16.msra.mxu0 0
        %2334 = vmatprep.subr.bf16.mxu0 0
        %2335 = vmatpush2.bf16.msra.mxu0 0
        %2336 = vmatprep.subr.bf16.mxu0 0
        %2337 = vmatpush2.bf16.msra.mxu0 0
        %2338 = vmatprep.subr.bf16.mxu0 0
        %2339 = vmatpush2.bf16.msra.mxu0 0
        %2340 = vmatprep.subr.bf16.mxu0 0
        %2341 = vmatpush2.bf16.msra.mxu0 0
        %2342 = vmatprep.subr.bf16.mxu0 0
        %2343 = vmatpush2.bf16.msra.mxu0 0
        %2344 = vmatprep.subr.bf16.mxu0 0
        %2345 = vmatpush2.bf16.msra.mxu0 0
        %2346 = vmatprep.subr.bf16.mxu0 0
        %2347 = vmatpush2.bf16.msra.mxu0 0
        %2348 = vmatprep.mubr.bf16.mxu0 0
        %2349 = vmatmul.mubr.bf16.gmra.mxu0 %v1926
        %v2350 = vpop.f32.mrf.mxu0
        %v2351 = vadd.f32 %v1996, %v2350
        %v2352 = vpop.f32.mrf.mxu0
        %v2353 = vadd.f32 %v2000, %v2352
        %v2354 = vpop.f32.mrf.mxu0
        %v2355 = vadd.f32 %v1996, %v2354
        %v2356 = vpop.f32.mrf.mxu0
        %v2357 = vadd.f32 %v2000, %v2356
        %2358 = vdwg.mxu0
        %2359 = vmatprep.subr.bf16.mxu0 %v2256
        %2360 = vmatpush1.bf16.msra.mxu0 %v2255
        %2361 = vmatprep.subr.bf16.mxu0 %v2249
        %2362 = vmatpush1.bf16.msra.mxu0 %v2248
        %2363 = vmatprep.subr.bf16.mxu0 %v2242
        %2364 = vmatpush1.bf16.msra.mxu0 %v2241
        %2365 = vmatprep.subr.bf16.mxu0 %v2235
        %2366 = vmatpush1.bf16.msra.mxu0 %v2234
        %2367 = vmatprep.subr.bf16.mxu0 %v2228
        %2368 = vmatpush1.bf16.msra.mxu0 %v2227
        %2369 = vmatprep.subr.bf16.mxu0 %v2221
        %2370 = vmatpush1.bf16.msra.mxu0 %v2220
        %2371 = vmatprep.subr.bf16.mxu0 %v2214
        %2372 = vmatpush1.bf16.msra.mxu0 %v2213
        %2373 = vmatprep.subr.bf16.mxu0 %v2207
        %2374 = vmatpush1.bf16.msra.mxu0 %v2206
        %2375 = vmatprep.subr.bf16.mxu0 0
        %2376 = vmatpush2.bf16.msra.mxu0 0
        %2377 = vmatprep.subr.bf16.mxu0 0
        %2378 = vmatpush2.bf16.msra.mxu0 0
        %2379 = vmatprep.subr.bf16.mxu0 0
        %2380 = vmatpush2.bf16.msra.mxu0 0
        %2381 = vmatprep.subr.bf16.mxu0 0
        %2382 = vmatpush2.bf16.msra.mxu0 0
        %2383 = vmatprep.subr.bf16.mxu0 0
        %2384 = vmatpush2.bf16.msra.mxu0 0
        %2385 = vmatprep.subr.bf16.mxu0 0
        %2386 = vmatpush2.bf16.msra.mxu0 0
        %2387 = vmatprep.subr.bf16.mxu0 0
        %2388 = vmatpush2.bf16.msra.mxu0 0
        %2389 = vmatprep.subr.bf16.mxu0 0
        %2390 = vmatpush2.bf16.msra.mxu0 0
        %2391 = vmatprep.mubr.bf16.mxu0 0
        %2392 = vmatmul.mubr.bf16.gmra.mxu0 %v1926
        %v2393 = vpop.f32.mrf.mxu0
        %v2394 = vadd.f32 %v2004, %v2393
        %v2395 = vpop.f32.mrf.mxu0
        %v2396 = vadd.f32 %v2008, %v2395
        %v2397 = vpop.f32.mrf.mxu0
        %v2398 = vadd.f32 %v2004, %v2397
        %v2399 = vpop.f32.mrf.mxu0
        %v2400 = vadd.f32 %v2008, %v2399
        %2401 = vdwg.mxu0
        %2402 = vmatprep.subr.bf16.mxu0 %v2258
        %2403 = vmatpush1.bf16.msra.mxu0 %v2257
        %2404 = vmatprep.subr.bf16.mxu0 %v2251
        %2405 = vmatpush1.bf16.msra.mxu0 %v2250
        %2406 = vmatprep.subr.bf16.mxu0 %v2244
        %2407 = vmatpush1.bf16.msra.mxu0 %v2243
        %2408 = vmatprep.subr.bf16.mxu0 %v2237
        %2409 = vmatpush1.bf16.msra.mxu0 %v2236
        %2410 = vmatprep.subr.bf16.mxu0 %v2230
        %2411 = vmatpush1.bf16.msra.mxu0 %v2229
        %2412 = vmatprep.subr.bf16.mxu0 %v2223
        %2413 = vmatpush1.bf16.msra.mxu0 %v2222
        %2414 = vmatprep.subr.bf16.mxu0 %v2216
        %2415 = vmatpush1.bf16.msra.mxu0 %v2215
        %2416 = vmatprep.subr.bf16.mxu0 %v2209
        %2417 = vmatpush1.bf16.msra.mxu0 %v2208
        %2418 = vmatprep.subr.bf16.mxu0 0
        %2419 = vmatpush2.bf16.msra.mxu0 0
        %2420 = vmatprep.subr.bf16.mxu0 0
        %2421 = vmatpush2.bf16.msra.mxu0 0
        %2422 = vmatprep.subr.bf16.mxu0 0
        %2423 = vmatpush2.bf16.msra.mxu0 0
        %2424 = vmatprep.subr.bf16.mxu0 0
        %2425 = vmatpush2.bf16.msra.mxu0 0
        %2426 = vmatprep.subr.bf16.mxu0 0
        %2427 = vmatpush2.bf16.msra.mxu0 0
        %2428 = vmatprep.subr.bf16.mxu0 0
        %2429 = vmatpush2.bf16.msra.mxu0 0
        %2430 = vmatprep.subr.bf16.mxu0 0
        %2431 = vmatpush2.bf16.msra.mxu0 0
        %2432 = vmatprep.subr.bf16.mxu0 0
        %2433 = vmatpush2.bf16.msra.mxu0 0
        %2434 = vmatprep.mubr.bf16.mxu0 0
        %2435 = vmatmul.mubr.bf16.gmra.mxu0 %v1926
        %v2436 = vpop.f32.mrf.mxu0
        %v2437 = vadd.f32 %v2012, %v2436
        %v2438 = vpop.f32.mrf.mxu0
        %v2439 = vadd.f32 %v2016, %v2438
        %v2440 = vpop.f32.mrf.mxu0
        %v2441 = vadd.f32 %v2012, %v2440
        %v2442 = vpop.f32.mrf.mxu0
        %v2443 = vadd.f32 %v2016, %v2442
        %2444 = vdwg.mxu0
        %2445 = vmatprep.subr.bf16.mxu0 0
        %2446 = vmatpush1.bf16.msra.mxu0 %v2259
        %2447 = vmatprep.subr.bf16.mxu0 0
        %2448 = vmatpush1.bf16.msra.mxu0 %v2252
        %2449 = vmatprep.subr.bf16.mxu0 0
        %2450 = vmatpush1.bf16.msra.mxu0 %v2245
        %2451 = vmatprep.subr.bf16.mxu0 0
        %2452 = vmatpush1.bf16.msra.mxu0 %v2238
        %2453 = vmatprep.subr.bf16.mxu0 0
        %2454 = vmatpush1.bf16.msra.mxu0 %v2231
        %2455 = vmatprep.subr.bf16.mxu0 0
        %2456 = vmatpush1.bf16.msra.mxu0 %v2224
        %2457 = vmatprep.subr.bf16.mxu0 0
        %2458 = vmatpush1.bf16.msra.mxu0 %v2217
        %2459 = vmatprep.subr.bf16.mxu0 0
        %2460 = vmatpush1.bf16.msra.mxu0 %v2210
        %2461 = vmatprep.subr.bf16.mxu0 0
        %2462 = vmatpush2.bf16.msra.mxu0 0
        %2463 = vmatprep.subr.bf16.mxu0 0
        %2464 = vmatpush2.bf16.msra.mxu0 0
        %2465 = vmatprep.subr.bf16.mxu0 0
        %2466 = vmatpush2.bf16.msra.mxu0 0
        %2467 = vmatprep.subr.bf16.mxu0 0
        %2468 = vmatpush2.bf16.msra.mxu0 0
        %2469 = vmatprep.subr.bf16.mxu0 0
        %2470 = vmatpush2.bf16.msra.mxu0 0
        %2471 = vmatprep.subr.bf16.mxu0 0
        %2472 = vmatpush2.bf16.msra.mxu0 0
        %2473 = vmatprep.subr.bf16.mxu0 0
        %2474 = vmatpush2.bf16.msra.mxu0 0
        %2475 = vmatprep.subr.bf16.mxu0 0
        %2476 = vmatpush2.bf16.msra.mxu0 0
        %2477 = vmatprep.mubr.bf16.mxu0 0
        %2478 = vmatmul.mubr.bf16.gmra.mxu0 %v1926
        %v2479 = vpop.f32.mrf.mxu0
        %v2480 = vadd.f32 %v2020, %v2479
        %v2481 = vpop.f32.mrf.mxu0
        %v2482 = vpop.f32.mrf.mxu0
        %v2483 = vadd.f32 %v2020, %v2482
        %v2484 = vpop.f32.mrf.mxu0
        %2485 = vdwg.mxu0
        %v2486 = vxor.u32 %v2351, 2147483648
        %v2487 = vxor.u32 %v2353, 2147483648
        %v2488 = vxor.u32 %v2394, 2147483648
        %v2489 = vxor.u32 %v2396, 2147483648
        %v2490 = vxor.u32 %v2437, 2147483648
        %v2491 = vxor.u32 %v2439, 2147483648
        %v2492 = vxor.u32 %v2480, 2147483648
        %v2493 = vxor.u32 %v2355, 2147483648
        %v2494 = vxor.u32 %v2357, 2147483648
        %v2495 = vxor.u32 %v2398, 2147483648
        %v2496 = vxor.u32 %v2400, 2147483648
        %v2497 = vxor.u32 %v2441, 2147483648
        %v2498 = vxor.u32 %v2443, 2147483648
        %v2499 = vxor.u32 %v2483, 2147483648
        %v2500 = vmul.f32 %v2486, 1.442695
        %v2501 = vpow.pop %v2500
        %v2502 = vmul.f32 %v2487, 1.442695
        %v2503 = vpow.pop %v2502
        %v2504 = vmul.f32 %v2488, 1.442695
        %v2505 = vpow.pop %v2504
        %v2506 = vmul.f32 %v2489, 1.442695
        %v2507 = vpow.pop %v2506
        %v2508 = vmul.f32 %v2490, 1.442695
        %v2509 = vpow.pop %v2508
        %v2510 = vmul.f32 %v2491, 1.442695
        %v2511 = vpow.pop %v2510
        %v2512 = vmul.f32 %v2492, 1.442695
        %v2513 = vpow.pop %v2512
        %v2514 = vmul.f32 %v2493, 1.442695
        %v2515 = vpow.pop %v2514
        %v2516 = vmul.f32 %v2494, 1.442695
        %v2517 = vpow.pop %v2516
        %v2518 = vmul.f32 %v2495, 1.442695
        %v2519 = vpow.pop %v2518
        %v2520 = vmul.f32 %v2496, 1.442695
        %v2521 = vpow.pop %v2520
        %v2522 = vmul.f32 %v2497, 1.442695
        %v2523 = vpow.pop %v2522
        %v2524 = vmul.f32 %v2498, 1.442695
        %v2525 = vpow.pop %v2524
        %v2526 = vmul.f32 %v2499, 1.442695
        %v2527 = vpow.pop %v2526
        %v2528 = vadd.f32 %v2501, 1.0
        %v2529 = vadd.f32 %v2503, 1.0
        %v2530 = vadd.f32 %v2505, 1.0
        %v2531 = vadd.f32 %v2507, 1.0
        %v2532 = vadd.f32 %v2509, 1.0
        %v2533 = vadd.f32 %v2511, 1.0
        %v2534 = vadd.f32 %v2513, 1.0
        %v2535 = vadd.f32 %v2515, 1.0
        %v2536 = vadd.f32 %v2517, 1.0
        %v2537 = vadd.f32 %v2519, 1.0
        %v2538 = vadd.f32 %v2521, 1.0
        %v2539 = vadd.f32 %v2523, 1.0
        %v2540 = vadd.f32 %v2525, 1.0
        %v2541 = vadd.f32 %v2527, 1.0
        %v2542 = vrcp.pop %v2528
        %v2543 = vmul.f32 1.0, %v2542
        %v2544 = vrcp.pop %v2529
        %v2545 = vmul.f32 1.0, %v2544
        %v2546 = vrcp.pop %v2530
        %v2547 = vmul.f32 1.0, %v2546
        %v2548 = vrcp.pop %v2531
        %v2549 = vmul.f32 1.0, %v2548
        %v2550 = vrcp.pop %v2532
        %v2551 = vmul.f32 1.0, %v2550
        %v2552 = vrcp.pop %v2533
        %v2553 = vmul.f32 1.0, %v2552
        %v2554 = vrcp.pop %v2534
        %v2555 = vmul.f32 1.0, %v2554
        %v2556 = vrcp.pop %v2535
        %v2557 = vmul.f32 1.0, %v2556
        %v2558 = vrcp.pop %v2536
        %v2559 = vmul.f32 1.0, %v2558
        %v2560 = vrcp.pop %v2537
        %v2561 = vmul.f32 1.0, %v2560
        %v2562 = vrcp.pop %v2538
        %v2563 = vmul.f32 1.0, %v2562
        %v2564 = vrcp.pop %v2539
        %v2565 = vmul.f32 1.0, %v2564
        %v2566 = vrcp.pop %v2540
        %v2567 = vmul.f32 1.0, %v2566
        %v2568 = vrcp.pop %v2541
        %v2569 = vmul.f32 1.0, %v2568
        %2570 = vst [vmem:[%s623] sm:$0xff] %v2543
        %2571 = vst [vmem:[%s623 + $0x8] sm:$0xff] %v2545
        %2572 = vst [vmem:[%s623 + $0x10] sm:$0xff] %v2547
        %2573 = vst [vmem:[%s623 + $0x18] sm:$0xff] %v2549
        %2574 = vst [vmem:[%s623 + $0x20] sm:$0xff] %v2551
        %2575 = vst [vmem:[%s623 + $0x28] sm:$0xff] %v2553
        %2576 = vst.msk [vmem:[%s623 + $0x30] sm:$0xff] %vm1059, %v2555
        %2577 = vst [vmem:[%s623 + $0x38] sm:$0xff] %v2557
        %2578 = vst [vmem:[%s623 + $0x40] sm:$0xff] %v2559
        %2579 = vst [vmem:[%s623 + $0x48] sm:$0xff] %v2561
        %2580 = vst [vmem:[%s623 + $0x50] sm:$0xff] %v2563
        %2581 = vst [vmem:[%s623 + $0x58] sm:$0xff] %v2565
        %2582 = vst [vmem:[%s623 + $0x60] sm:$0xff] %v2567
        %2583 = vst.msk [vmem:[%s623 + $0x68] sm:$0xff] %vm1059, %v2569
        %s2584 = smul.u32 2, %s35
        %p2585 = scmp.lt.s32.totalorder %s2584, 3
        %s2586 = scalar_select %p2585, %s2584, 3
        %s2587 = smul.addr %s2586, 4
        %s2588 = scalar_lea.vmem %s17, %s2587
        %s2589 = sand.u32 %s431, 1
        %s2590 = scalar_lea.sflag [#allocation4], %s2589
        %s2591 = sand.u32 %s431, 1
        %s2592 = smul.addr %s2591, 112
        %s2593 = scalar_lea.vmem [#allocation8], %s2592
        // Predicated region
        $region101: #{autoencoder_forward.1} parent=87 // pred_check
          %p2594 = pneg %p415
        $region102: #{autoencoder_forward.1} parent=87 // pred_check_branch
          %2596 = sbr.rel (%p2594) target = $region104
        $region103: #{autoencoder_forward.1} parent=87 // pred_region
          %s2597 = smul.u32 2, %s35
        $region104: #{autoencoder_forward.1} parent=87 // pred_fallthru
          _
        // Predicated region
        $region105: #{autoencoder_forward.1} parent=87 // pred_check
          %p2598 = pneg %p441
        $region106: #{autoencoder_forward.1} parent=87 // pred_check_branch
          %2600 = sbr.rel (%p2598) target = $region108
        $region107: #{autoencoder_forward.1} parent=87 // pred_region
          %s2601 = smul.u32 2, %s35
          %s2603 = ssub.s32 1792, 1792
          %2604 = vsyncadd %s2590, %s2603
          %s2605 = smul.addr %s2601, 7
          %s2606 = smul.addr %s2605, 128
          %s2607 = scalar_lea.hbm %s18, %s2606
          %s2608 = sshll.u32 %s2593, 4
          %s2609 = int_to_ptr.vmem [resolvable:$true] %s2608
          %2614 = dma.vmem_to_hbm [thread:$0]  %s2609, 1792, %s2607, %s2590, 896, 896, 56
        $region108: #{autoencoder_forward.1} parent=87 // pred_fallthru
          _
      $region88: #{autoencoder_forward.1} parent=5 // pred_fallthru
        _
      %p2615 = scmp.le.s32.totalorder 2, %s30
      // Predicated region
      $region109: #{autoencoder_forward.1} parent=5 // pred_check
        %p2616 = pneg %p2615
      $region110: #{autoencoder_forward.1} parent=5 // pred_check_branch
        %2618 = sbr.rel (%p2616) target = $region112
      $region111: #{autoencoder_forward.1} parent=5 // pred_region
        %s2619 = ssub.s32 %s30, 2
        // Predicated region
        $region113: #{autoencoder_forward.1} parent=111 // pred_check
          %p2620 = pneg %p421
        $region114: #{autoencoder_forward.1} parent=111 // pred_check_branch
          %2622 = sbr.rel (%p2620) target = $region116
        $region115: #{autoencoder_forward.1} parent=111 // pred_region
          %s2623 = smul.u32 2, %s36
          %p2624 = scmp.lt.s32.totalorder %s2623, 3
          %s2625 = scalar_select %p2624, %s2623, 3
          %s2626 = smul.addr %s2625, 4
          %s2627 = scalar_lea.vmem %s17, %s2626
        $region116: #{autoencoder_forward.1} parent=111 // pred_fallthru
          _
        // Predicated region
        $region117: #{autoencoder_forward.1} parent=111 // pred_check
          %p2628 = pneg %p447
        $region118: #{autoencoder_forward.1} parent=111 // pred_check_branch
          %2630 = sbr.rel (%p2628) target = $region120
        $region119: #{autoencoder_forward.1} parent=111 // pred_region
          %s2631 = sand.u32 %s432, 1
          %s2632 = scalar_lea.sflag [#allocation4], %s2631
          %s2633 = sand.u32 %s432, 1
          %s2634 = smul.addr %s2633, 112
          %s2635 = scalar_lea.vmem [#allocation8], %s2634
          %2636 = dma.done %s2632, 1792
        $region120: #{autoencoder_forward.1} parent=111 // pred_fallthru
          _
      $region112: #{autoencoder_forward.1} parent=5 // pred_fallthru
        _
    $region6: #{autoencoder_forward.1} parent=1 // loop_footer
      %s34 = sadd.s32 1, %s30
    $region7: #{autoencoder_forward.1} parent=1 // loop_footer_branch
      %29 = sbr.rel target = $region3
    $region8: #{autoencoder_forward.1} parent=1 // loop_exit
      _
    %2637 = vsyncpa [#allocation3], 1
    %s2638 = scalar_lea.sflag [#allocation3], 1
    %2639 = vsyncpa %s2638, 1
    %2640 = vsyncpa [#allocation6], 1
    %2641 = vsyncpa [#allocation4], 1
    %s2642 = scalar_lea.sflag [#allocation4], 1
    %2643 = vsyncpa %s2642, 1

</llo_original>
